<compile_context>
chip_gen: v6e
topology: v6e:2x2x1
jax: 0.10.0
libtpu: 0.0.40
codegen_flags: <defaults>
</compile_context>

<pallas_src>
import functools

import jax
import jax.numpy as jnp
from jax import lax
from jax.experimental import pallas as pl
from jax.experimental.pallas import tpu as pltpu


def _dyblock_kernel(x_ref, xmf_ref, w12_ref, b12_ref, w3_ref, b3_ref,
                    wg_ref, b4_ref, o_ref, zbuf_ref,
                    *, C, H, W, PAD, IPB, CDT):
    """IPB images per grid step, fully fused in VMEM.

    x_ref / xmf_ref : (IPB, C, H*W)   channels on sublanes, spatial on lanes
    w12, b12        : block-diag fused proj1/proj2 params ((2C,2C), (2C,1))
    w3, b3          : kernel_conv[0] 1x1-conv params, C -> 3C
    wg_ref          : (9, 3C, 3C) block-diagonal per-tap matrices of the grouped 3x3 conv
    b4_ref          : (3C, 1) grouped-conv bias
    o_ref           : (IPB, 3C, H*W)
    zbuf_ref        : (3C, H*W + 2*PAD) staging buffer (only pad stripes are zeroed)
    """
    HW = H * W
    C3 = 3 * C
    f32 = jnp.float32

    # Hoisted (shared by every image in this grid step).
    w12 = w12_ref[...]
    b12 = b12_ref[...].astype(f32)
    w3 = w3_ref[...]
    b3 = b3_ref[...].astype(f32)
    b4 = b4_ref[...].astype(f32)

    # (1, HW) column masks, broadcast over channels in the tap loop:
    # a +-1 shift along W must not wrap across image rows.
    col = lax.broadcasted_iota(jnp.int32, (1, HW), 1) % W
    ok_left = col >= 1           # source column w-1 exists (dw == -1)
    ok_right = col <= W - 2      # source column w+1 exists (dw == +1)

    # Zero only the two pad stripes; the interior is fully overwritten per image,
    # and the dh = +-1 boundary rows read zeros from these pads (conv zero-padding).
    zbuf_ref[:, :PAD] = jnp.zeros((C3, PAD), CDT)
    zbuf_ref[:, PAD + HW:] = jnp.zeros((C3, PAD), CDT)

    for n in range(IPB):         # static unroll, IPB is small
        # proj1(x) * proj2(x_mf): both 1x1 convs as ONE block-diagonal MXU matmul.
        xcat = jnp.concatenate([x_ref[n], xmf_ref[n]], axis=0)          # (2C, HW)
        y = jnp.dot(w12, xcat, preferred_element_type=f32) + b12        # (2C, HW) f32
        k = y[:C] * y[C:]                                               # (C, HW)  f32

        # kernel_conv[0]: 1x1 conv C -> 3C (z never leaves VMEM).
        z = jnp.dot(w3, k.astype(CDT), preferred_element_type=f32) + b3  # (3C, HW) f32
        z_c = z.astype(CDT)

        # Stage z so every off-centre 3x3 tap is a single static-offset window load.
        zbuf_ref[:, pl.ds(PAD, HW)] = z_c

        acc = jnp.zeros((C3, HW), f32)
        tap = 0
        for dh in (-1, 0, 1):
            for dw in (-1, 0, 1):
                if dh == 0 and dw == 0:
                    zs = z_c                                  # reuse from registers
                else:
                    off = PAD + dh * W + dw                   # static, >= 0 (PAD >= W+1)
                    zs = zbuf_ref[:, pl.ds(off, HW)]
                    if dw == -1:
                        zs = jnp.where(ok_left, zs, 0.0)
                    elif dw == 1:
                        zs = jnp.where(ok_right, zs, 0.0)
                # Block-diagonal channel mixing of the grouped (groups = C) 3x3 conv.
                acc = acc + jnp.dot(wg_ref[tap], zs, preferred_element_type=f32)
                tap += 1

        o_ref[n] = (acc + b4).astype(o_ref.dtype)


def _grouped_tap_matrices(w4, dtype):
    """(3C, 3, 3, 3) grouped-conv weights -> (9, 3C, 3C) block-diagonal tap matrices.

    Tap order matches the kernel: kh (= dh+1) outer, kw (= dw+1) inner.
    Entry [tap, o, i] = w4[o, i - 3*(o//3), kh, kw] when i is in o's group, else 0.
    """
    C3 = w4.shape[0]
    grp = jnp.arange(C3) // 3
    block_mask = grp[:, None] == grp[None, :]
    i_local = jnp.arange(C3) % 3
    mats = []
    for kh in range(3):
        for kw in range(3):
            full = w4[:, :, kh, kw][:, i_local]               # (C3, C3)
            mats.append(jnp.where(block_mask, full, jnp.zeros((), w4.dtype)))
    return jnp.stack(mats, axis=0).astype(dtype)


def _tpu_vmem_limit_bytes():
    """Generation-aware VMEM limit: ~3/4 of physical, capped at 100 MiB."""
    cap = 64 * 1024 * 1024
    try:
        cap = int(pltpu.get_tpu_info().vmem_capacity_bytes)
    except Exception:
        pass
    return min((cap * 3) // 4, 100 * 1024 * 1024)


def dyblock(x, x_mf, params):
    """Pallas DyBlock forward.  x, x_mf: (N, C, H, W) -> (N, 3C, H, W)."""
    N, C, H, W = x.shape
    HW = H * W
    C2 = 2 * C
    C3 = 3 * C
    f32 = jnp.float32
    cdt = x.dtype                                  # matmul operand dtype (bf16 stays bf16)

    # Native NCHW layout: flattening spatial onto the lane axis is a free reshape.
    x3 = x.reshape(N, C, HW)
    xmf3 = x_mf.reshape(N, C, HW)

    # proj1/proj2 fused into one block-diagonal (2C, 2C) weight (one MXU push).
    w1 = params["w1"].reshape(C, C).astype(cdt)
    w2 = params["w2"].reshape(C, C).astype(cdt)
    w12 = jnp.zeros((C2, C2), cdt).at[:C, :C].set(w1).at[C:, C:].set(w2)
    b12 = jnp.concatenate(
        [params["b1"].reshape(C, 1), params["b2"].reshape(C, 1)], axis=0).astype(f32)

    w3 = params["w3"].reshape(C3, C).astype(cdt)
    b3 = params["b3"].reshape(C3, 1).astype(f32)
    wg = _grouped_tap_matrices(params["w4"], cdt)              # (9, 3C, 3C)
    b4 = params["b4"].reshape(C3, 1).astype(f32)

    # Lane-aligned padding of the flattened spatial axis (>= W+1 on each side).
    PAD = ((W + 1 + 127) // 128) * 128
    L = HW + 2 * PAD

    vmem_limit = _tpu_vmem_limit_bytes()

    # Pack several images per grid step while the working set stays well under the
    # VMEM budget (amortises the ~0.35 us per-step overhead at small shapes;
    # degrades to 1 image/step at production sizes).
    isz = x.dtype.itemsize
    per_img = 2 * (2 * C * HW * isz) + 2 * (C3 * HW * isz) + 6 * C3 * HW * 4
    fixed = C3 * L * isz + (9 * C3 * C3 + C2 * C2 + C3 * C + 6 * C3) * isz
    ipb = max(1, min(N, 8, int((0.5 * vmem_limit - fixed) // max(per_img, 1))))
    while N % ipb:
        ipb -= 1

    kernel = functools.partial(_dyblock_kernel, C=C, H=H, W=W, PAD=PAD, IPB=ipb, CDT=cdt)

    out3 = pl.pallas_call(
        kernel,
        out_shape=jax.ShapeDtypeStruct((N, C3, HW), x.dtype),
        grid_spec=pltpu.PrefetchScalarGridSpec(
            num_scalar_prefetch=0,
            grid=(N // ipb,),
            in_specs=[
                pl.BlockSpec((ipb, C, HW), lambda g: (g, 0, 0)),
                pl.BlockSpec((ipb, C, HW), lambda g: (g, 0, 0)),
                pl.BlockSpec((C2, C2), lambda g: (0, 0)),
                pl.BlockSpec((C2, 1), lambda g: (0, 0)),
                pl.BlockSpec((C3, C), lambda g: (0, 0)),
                pl.BlockSpec((C3, 1), lambda g: (0, 0)),
                pl.BlockSpec((9, C3, C3), lambda g: (0, 0, 0)),
                pl.BlockSpec((C3, 1), lambda g: (0, 0)),
            ],
            out_specs=pl.BlockSpec((ipb, C3, HW), lambda g: (g, 0, 0)),
            scratch_shapes=[pltpu.VMEM((C3, L), cdt)],
        ),
        compiler_params=pltpu.CompilerParams(
            dimension_semantics=("parallel",),       # shard batch blocks across v7x's 2 TCs
            vmem_limit_bytes=vmem_limit,
        ),
    )(x3, xmf3, w12, b12, w3, b3, wg, b4)

    return out3.reshape(N, C3, H, W)


def dyblock_ref(x, x_mf, params):
    """Pure-JAX reference matching the PyTorch DyBlock.forward."""
    hp = lax.Precision.HIGHEST
    C = x.shape[1]

    def conv1x1(inp, w, b):
        return (jnp.einsum("oc,nchw->nohw", w, inp, precision=hp)
                + b.reshape(1, -1, 1, 1))

    y = conv1x1(x, params["w1"], params["b1"]) * conv1x1(x_mf, params["w2"], params["b2"])
    z = conv1x1(y, params["w3"], params["b3"])
    out = lax.conv_general_dilated(
        z, params["w4"], window_strides=(1, 1), padding=((1, 1), (1, 1)),
        dimension_numbers=("NCHW", "OIHW", "NCHW"),
        feature_group_count=C, precision=hp)
    return out + params["b4"].reshape(1, -1, 1, 1)


if __name__ == "__main__":
    key = jax.random.PRNGKey(0)
    keys = jax.random.split(key, 10)

    N, C, H, W = 2, 4, 16, 16
    x = jax.random.normal(keys[0], (N, C, H, W), dtype=jnp.float32)
    x_mf = jax.random.normal(keys[1], (N, C, H, W), dtype=jnp.float32)

    s = 0.3  # keep activations O(1)
    params = dict(
        w1=s * jax.random.normal(keys[2], (C, C), jnp.float32),
        b1=s * jax.random.normal(keys[3], (C,), jnp.float32),
        w2=s * jax.random.normal(keys[4], (C, C), jnp.float32),
        b2=s * jax.random.normal(keys[5], (C,), jnp.float32),
        w3=s * jax.random.normal(keys[6], (3 * C, C), jnp.float32),
        b3=s * jax.random.normal(keys[7], (3 * C,), jnp.float32),
        w4=s * jax.random.normal(keys[8], (3 * C, 3, 3, 3), jnp.float32),
        b4=s * jax.random.normal(keys[9], (3 * C,), jnp.float32),
    )

    out = dyblock(x, x_mf, params)
    out = jax.block_until_ready(out)

    ref = dyblock_ref(x, x_mf, params)
    assert out.shape == (N, 3 * C, H, W)
    assert jnp.allclose(out, ref, atol=2e-3, rtol=2e-3), "mismatch vs reference"

    print("KERNEL_OK")
</pallas_src>

<mosaic_0001>
module attributes {stable_mosaic.version = 11 : i64} {
  func.func @_dyblock_kernel(%arg0: i32, %arg1: memref<2x4x256xf32, #tpu.memory_space<vmem>>, %arg2: memref<2x4x256xf32, #tpu.memory_space<vmem>>, %arg3: memref<8x8xf32, #tpu.memory_space<vmem>>, %arg4: memref<8x1xf32, #tpu.memory_space<vmem>>, %arg5: memref<12x4xf32, #tpu.memory_space<vmem>>, %arg6: memref<12x1xf32, #tpu.memory_space<vmem>>, %arg7: memref<9x12x12xf32, #tpu.memory_space<vmem>>, %arg8: memref<12x1xf32, #tpu.memory_space<vmem>>, %arg9: memref<2x12x256xf32, #tpu.memory_space<vmem>>, %arg10: memref<12x512xf32, #tpu.memory_space<vmem>>) attributes {dimension_semantics = [#tpu.dimension_semantics<parallel>], iteration_bounds = array<i64: 1>, scalar_prefetch = 0 : i64, scratch_operands = 1 : i64, tpu.core_type = #tpu.core_type<tc>, window_params = [{transform_indices = @transform_0, window_bounds = array<i64: 2, 4, 256>}, {transform_indices = @transform_1, window_bounds = array<i64: 2, 4, 256>}, {pipeline_mode = #tpu.pipeline_mode<synchronous>, transform_indices = @transform_2, window_bounds = array<i64: 8, 8>}, {pipeline_mode = #tpu.pipeline_mode<synchronous>, transform_indices = @transform_3, window_bounds = array<i64: 8, 1>}, {pipeline_mode = #tpu.pipeline_mode<synchronous>, transform_indices = @transform_4, window_bounds = array<i64: 12, 4>}, {pipeline_mode = #tpu.pipeline_mode<synchronous>, transform_indices = @transform_5, window_bounds = array<i64: 12, 1>}, {pipeline_mode = #tpu.pipeline_mode<synchronous>, transform_indices = @transform_6, window_bounds = array<i64: 9, 12, 12>}, {pipeline_mode = #tpu.pipeline_mode<synchronous>, transform_indices = @transform_7, window_bounds = array<i64: 12, 1>}, {transform_indices = @transform_8, window_bounds = array<i64: 2, 12, 256>}]} {
    %c0 = arith.constant 0 : index
    %c0_0 = arith.constant 0 : index
    %0 = vector.load %arg3[%c0, %c0_0] : memref<8x8xf32, #tpu.memory_space<vmem>>, vector<8x8xf32>
    %c0_1 = arith.constant 0 : index
    %c0_2 = arith.constant 0 : index
    %1 = vector.load %arg4[%c0_1, %c0_2] : memref<8x1xf32, #tpu.memory_space<vmem>>, vector<8x1xf32>
    %c0_3 = arith.constant 0 : index
    %c0_4 = arith.constant 0 : index
    %2 = vector.load %arg5[%c0_3, %c0_4] : memref<12x4xf32, #tpu.memory_space<vmem>>, vector<12x4xf32>
    %c0_5 = arith.constant 0 : index
    %c0_6 = arith.constant 0 : index
    %3 = vector.load %arg6[%c0_5, %c0_6] : memref<12x1xf32, #tpu.memory_space<vmem>>, vector<12x1xf32>
    %c0_7 = arith.constant 0 : index
    %c0_8 = arith.constant 0 : index
    %4 = vector.load %arg8[%c0_7, %c0_8] : memref<12x1xf32, #tpu.memory_space<vmem>>, vector<12x1xf32>
    %5 = tpu.iota {dimensions = array<i32: 1>} : vector<1x256xi32>
    %c16_i32 = arith.constant 16 : i32
    %c0_i32 = arith.constant 0 : i32
    %6 = arith.cmpi eq, %c16_i32, %c0_i32 : i32
    %c1_i32 = arith.constant 1 : i32
    %7 = arith.select %6, %c1_i32, %c16_i32 : i32
    %8 = vector.broadcast %7 : i32 to vector<1x256xi32>
    %9 = arith.remsi %5, %8 : vector<1x256xi32>
    %c0_i32_9 = arith.constant 0 : i32
    %10 = vector.broadcast %c0_i32_9 : i32 to vector<1x256xi32>
    %11 = arith.cmpi ne, %9, %10 : vector<1x256xi32>
    %c0_i32_10 = arith.constant 0 : i32
    %12 = vector.broadcast %c0_i32_10 : i32 to vector<1x256xi32>
    %13 = arith.cmpi slt, %9, %12 : vector<1x256xi32>
    %c0_i32_11 = arith.constant 0 : i32
    %14 = arith.cmpi slt, %7, %c0_i32_11 : i32
    %15 = vector.broadcast %14 : i1 to vector<1x256xi1>
    %16 = vector.broadcast %15 : vector<1x256xi1> to vector<1x256xi1>
    %17 = arith.xori %13, %16 : vector<1x256xi1>
    %18 = arith.andi %17, %11 : vector<1x256xi1>
    %19 = vector.broadcast %7 : i32 to vector<1x256xi32>
    %20 = arith.addi %9, %19 : vector<1x256xi32>
    %21 = arith.select %18, %20, %9 : vector<1x256xi1>, vector<1x256xi32>
    %c1_i32_12 = arith.constant 1 : i32
    %22 = vector.broadcast %c1_i32_12 : i32 to vector<1x256xi32>
    %23 = arith.cmpi sge, %21, %22 : vector<1x256xi32>
    %c14_i32 = arith.constant 14 : i32
    %24 = vector.broadcast %c14_i32 : i32 to vector<1x256xi32>
    %25 = arith.cmpi sle, %21, %24 : vector<1x256xi32>
    %cst = arith.constant 0.000000e+00 : f32
    %26 = vector.broadcast %cst : f32 to vector<12x128xf32>
    %c0_13 = arith.constant 0 : index
    %c0_14 = arith.constant 0 : index
    %27 = vector.load %arg10[%c0_13, %c0_14] : memref<12x512xf32, #tpu.memory_space<vmem>>, vector<12x128xf32>
    tpu.vector_store %arg10[%c0_13, %c0_14], %26 {strides = array<i32>} : memref<12x512xf32, #tpu.memory_space<vmem>>, vector<12x128xf32>,
    %cst_15 = arith.constant 0.000000e+00 : f32
    %28 = vector.broadcast %cst_15 : f32 to vector<12x128xf32>
    %c0_16 = arith.constant 0 : index
    %c384 = arith.constant 384 : index
    %29 = vector.load %arg10[%c0_16, %c384] : memref<12x512xf32, #tpu.memory_space<vmem>>, vector<12x128xf32>
    tpu.vector_store %arg10[%c0_16, %c384], %28 {strides = array<i32>} : memref<12x512xf32, #tpu.memory_space<vmem>>, vector<12x128xf32>,
    %c0_17 = arith.constant 0 : index
    %c0_18 = arith.constant 0 : index
    %c0_19 = arith.constant 0 : index
    %30 = vector.load %arg1[%c0_17, %c0_18, %c0_19] : memref<2x4x256xf32, #tpu.memory_space<vmem>>, vector<1x4x256xf32>
    %31 = vector.shape_cast %30 : vector<1x4x256xf32> to vector<4x256xf32>
    %c0_20 = arith.constant 0 : index
    %c0_21 = arith.constant 0 : index
    %c0_22 = arith.constant 0 : index
    %32 = vector.load %arg2[%c0_20, %c0_21, %c0_22] : memref<2x4x256xf32, #tpu.memory_space<vmem>>, vector<1x4x256xf32>
    %33 = vector.shape_cast %32 : vector<1x4x256xf32> to vector<4x256xf32>
    %34 = tpu.concatenate %31, %33 in 0 : vector<4x256xf32>, vector<4x256xf32> -> vector<8x256xf32>
    %cst_23 = arith.constant dense<0.000000e+00> : vector<8x256xf32>
    %35 = tpu.matmul %0, %34, %cst_23 {dimension_numbers = #tpu.dot_dimension_numbers<[1], [0], [0], [1], [0, 0, 1, 1], [], []>} : vector<8x8xf32>, vector<8x256xf32>, vector<8x256xf32> -> vector<8x256xf32>
    %36 = vector.broadcast %1 : vector<8x1xf32> to vector<8x256xf32>
    %37 = arith.addf %35, %36 : vector<8x256xf32>
    %38 = vector.extract_strided_slice %37 {offsets = [0, 0], sizes = [4, 256], strides = [1, 1]} : vector<8x256xf32> to vector<4x256xf32>
    %39 = vector.extract_strided_slice %37 {offsets = [4, 0], sizes = [4, 256], strides = [1, 1]} : vector<8x256xf32> to vector<4x256xf32>
    %40 = arith.mulf %38, %39 : vector<4x256xf32>
    %cst_24 = arith.constant dense<0.000000e+00> : vector<12x256xf32>
    %41 = tpu.matmul %2, %40, %cst_24 {dimension_numbers = #tpu.dot_dimension_numbers<[1], [0], [0], [1], [0, 0, 1, 1], [], []>} : vector<12x4xf32>, vector<4x256xf32>, vector<12x256xf32> -> vector<12x256xf32>
    %42 = vector.broadcast %3 : vector<12x1xf32> to vector<12x256xf32>
    %43 = arith.addf %41, %42 : vector<12x256xf32>
    %c0_25 = arith.constant 0 : index
    %c128 = arith.constant 128 : index
    %44 = vector.load %arg10[%c0_25, %c128] : memref<12x512xf32, #tpu.memory_space<vmem>>, vector<12x256xf32>
    tpu.vector_store %arg10[%c0_25, %c128], %43 {strides = array<i32>} : memref<12x512xf32, #tpu.memory_space<vmem>>, vector<12x256xf32>,
    %cst_26 = arith.constant 0.000000e+00 : f32
    %45 = vector.broadcast %cst_26 : f32 to vector<12x256xf32>
    %c0_27 = arith.constant 0 : index
    %c111 = arith.constant 111 : index
    %46 = vector.load %arg10[%c0_27, %c111] : memref<12x512xf32, #tpu.memory_space<vmem>>, vector<12x256xf32>
    %cst_28 = arith.constant 0.000000e+00 : f32
    %47 = vector.shape_cast %23 : vector<1x256xi1> to vector<1x256xi1>
    %48 = vector.broadcast %47 : vector<1x256xi1> to vector<12x256xi1>
    %49 = vector.broadcast %cst_28 : f32 to vector<12x256xf32>
    %50 = arith.select %48, %46, %49 : vector<12x256xi1>, vector<12x256xf32>
    %c0_29 = arith.constant 0 : index
    %c0_30 = arith.constant 0 : index
    %c0_31 = arith.constant 0 : index
    %51 = vector.load %arg7[%c0_29, %c0_30, %c0_31] : memref<9x12x12xf32, #tpu.memory_space<vmem>>, vector<1x12x12xf32>
    %52 = vector.shape_cast %51 : vector<1x12x12xf32> to vector<12x12xf32>
    %cst_32 = arith.constant dense<0.000000e+00> : vector<12x256xf32>
    %53 = tpu.matmul %52, %50, %cst_32 {dimension_numbers = #tpu.dot_dimension_numbers<[1], [0], [0], [1], [0, 0, 1, 1], [], []>} : vector<12x12xf32>, vector<12x256xf32>, vector<12x256xf32> -> vector<12x256xf32>
    %54 = arith.addf %45, %53 : vector<12x256xf32>
    %c0_33 = arith.constant 0 : index
    %c112 = arith.constant 112 : index
    %55 = vector.load %arg10[%c0_33, %c112] : memref<12x512xf32, #tpu.memory_space<vmem>>, vector<12x256xf32>
    %c1 = arith.constant 1 : index
    %c0_34 = arith.constant 0 : index
    %c0_35 = arith.constant 0 : index
    %56 = vector.load %arg7[%c1, %c0_34, %c0_35] : memref<9x12x12xf32, #tpu.memory_space<vmem>>, vector<1x12x12xf32>
    %57 = vector.shape_cast %56 : vector<1x12x12xf32> to vector<12x12xf32>
    %cst_36 = arith.constant dense<0.000000e+00> : vector<12x256xf32>
    %58 = tpu.matmul %57, %55, %cst_36 {dimension_numbers = #tpu.dot_dimension_numbers<[1], [0], [0], [1], [0, 0, 1, 1], [], []>} : vector<12x12xf32>, vector<12x256xf32>, vector<12x256xf32> -> vector<12x256xf32>
    %59 = arith.addf %54, %58 : vector<12x256xf32>
    %c0_37 = arith.constant 0 : index
    %c113 = arith.constant 113 : index
    %60 = vector.load %arg10[%c0_37, %c113] : memref<12x512xf32, #tpu.memory_space<vmem>>, vector<12x256xf32>
    %cst_38 = arith.constant 0.000000e+00 : f32
    %61 = vector.shape_cast %25 : vector<1x256xi1> to vector<1x256xi1>
    %62 = vector.broadcast %61 : vector<1x256xi1> to vector<12x256xi1>
    %63 = vector.broadcast %cst_38 : f32 to vector<12x256xf32>
    %64 = arith.select %62, %60, %63 : vector<12x256xi1>, vector<12x256xf32>
    %c2 = arith.constant 2 : index
    %c0_39 = arith.constant 0 : index
    %c0_40 = arith.constant 0 : index
    %65 = vector.load %arg7[%c2, %c0_39, %c0_40] : memref<9x12x12xf32, #tpu.memory_space<vmem>>, vector<1x12x12xf32>
    %66 = vector.shape_cast %65 : vector<1x12x12xf32> to vector<12x12xf32>
    %cst_41 = arith.constant dense<0.000000e+00> : vector<12x256xf32>
    %67 = tpu.matmul %66, %64, %cst_41 {dimension_numbers = #tpu.dot_dimension_numbers<[1], [0], [0], [1], [0, 0, 1, 1], [], []>} : vector<12x12xf32>, vector<12x256xf32>, vector<12x256xf32> -> vector<12x256xf32>
    %68 = arith.addf %59, %67 : vector<12x256xf32>
    %c0_42 = arith.constant 0 : index
    %c127 = arith.constant 127 : index
    %69 = vector.load %arg10[%c0_42, %c127] : memref<12x512xf32, #tpu.memory_space<vmem>>, vector<12x256xf32>
    %cst_43 = arith.constant 0.000000e+00 : f32
    %70 = vector.shape_cast %23 : vector<1x256xi1> to vector<1x256xi1>
    %71 = vector.broadcast %70 : vector<1x256xi1> to vector<12x256xi1>
    %72 = vector.broadcast %cst_43 : f32 to vector<12x256xf32>
    %73 = arith.select %71, %69, %72 : vector<12x256xi1>, vector<12x256xf32>
    %c3 = arith.constant 3 : index
    %c0_44 = arith.constant 0 : index
    %c0_45 = arith.constant 0 : index
    %74 = vector.load %arg7[%c3, %c0_44, %c0_45] : memref<9x12x12xf32, #tpu.memory_space<vmem>>, vector<1x12x12xf32>
    %75 = vector.shape_cast %74 : vector<1x12x12xf32> to vector<12x12xf32>
    %cst_46 = arith.constant dense<0.000000e+00> : vector<12x256xf32>
    %76 = tpu.matmul %75, %73, %cst_46 {dimension_numbers = #tpu.dot_dimension_numbers<[1], [0], [0], [1], [0, 0, 1, 1], [], []>} : vector<12x12xf32>, vector<12x256xf32>, vector<12x256xf32> -> vector<12x256xf32>
    %77 = arith.addf %68, %76 : vector<12x256xf32>
    %c4 = arith.constant 4 : index
    %c0_47 = arith.constant 0 : index
    %c0_48 = arith.constant 0 : index
    %78 = vector.load %arg7[%c4, %c0_47, %c0_48] : memref<9x12x12xf32, #tpu.memory_space<vmem>>, vector<1x12x12xf32>
    %79 = vector.shape_cast %78 : vector<1x12x12xf32> to vector<12x12xf32>
    %cst_49 = arith.constant dense<0.000000e+00> : vector<12x256xf32>
    %80 = tpu.matmul %79, %43, %cst_49 {dimension_numbers = #tpu.dot_dimension_numbers<[1], [0], [0], [1], [0, 0, 1, 1], [], []>} : vector<12x12xf32>, vector<12x256xf32>, vector<12x256xf32> -> vector<12x256xf32>
    %81 = arith.addf %77, %80 : vector<12x256xf32>
    %c0_50 = arith.constant 0 : index
    %c129 = arith.constant 129 : index
    %82 = vector.load %arg10[%c0_50, %c129] : memref<12x512xf32, #tpu.memory_space<vmem>>, vector<12x256xf32>
    %cst_51 = arith.constant 0.000000e+00 : f32
    %83 = vector.shape_cast %25 : vector<1x256xi1> to vector<1x256xi1>
    %84 = vector.broadcast %83 : vector<1x256xi1> to vector<12x256xi1>
    %85 = vector.broadcast %cst_51 : f32 to vector<12x256xf32>
    %86 = arith.select %84, %82, %85 : vector<12x256xi1>, vector<12x256xf32>
    %c5 = arith.constant 5 : index
    %c0_52 = arith.constant 0 : index
    %c0_53 = arith.constant 0 : index
    %87 = vector.load %arg7[%c5, %c0_52, %c0_53] : memref<9x12x12xf32, #tpu.memory_space<vmem>>, vector<1x12x12xf32>
    %88 = vector.shape_cast %87 : vector<1x12x12xf32> to vector<12x12xf32>
    %cst_54 = arith.constant dense<0.000000e+00> : vector<12x256xf32>
    %89 = tpu.matmul %88, %86, %cst_54 {dimension_numbers = #tpu.dot_dimension_numbers<[1], [0], [0], [1], [0, 0, 1, 1], [], []>} : vector<12x12xf32>, vector<12x256xf32>, vector<12x256xf32> -> vector<12x256xf32>
    %90 = arith.addf %81, %89 : vector<12x256xf32>
    %c0_55 = arith.constant 0 : index
    %c143 = arith.constant 143 : index
    %91 = vector.load %arg10[%c0_55, %c143] : memref<12x512xf32, #tpu.memory_space<vmem>>, vector<12x256xf32>
    %cst_56 = arith.constant 0.000000e+00 : f32
    %92 = vector.shape_cast %23 : vector<1x256xi1> to vector<1x256xi1>
    %93 = vector.broadcast %92 : vector<1x256xi1> to vector<12x256xi1>
    %94 = vector.broadcast %cst_56 : f32 to vector<12x256xf32>
    %95 = arith.select %93, %91, %94 : vector<12x256xi1>, vector<12x256xf32>
    %c6 = arith.constant 6 : index
    %c0_57 = arith.constant 0 : index
    %c0_58 = arith.constant 0 : index
    %96 = vector.load %arg7[%c6, %c0_57, %c0_58] : memref<9x12x12xf32, #tpu.memory_space<vmem>>, vector<1x12x12xf32>
    %97 = vector.shape_cast %96 : vector<1x12x12xf32> to vector<12x12xf32>
    %cst_59 = arith.constant dense<0.000000e+00> : vector<12x256xf32>
    %98 = tpu.matmul %97, %95, %cst_59 {dimension_numbers = #tpu.dot_dimension_numbers<[1], [0], [0], [1], [0, 0, 1, 1], [], []>} : vector<12x12xf32>, vector<12x256xf32>, vector<12x256xf32> -> vector<12x256xf32>
    %99 = arith.addf %90, %98 : vector<12x256xf32>
    %c0_60 = arith.constant 0 : index
    %c144 = arith.constant 144 : index
    %100 = vector.load %arg10[%c0_60, %c144] : memref<12x512xf32, #tpu.memory_space<vmem>>, vector<12x256xf32>
    %c7 = arith.constant 7 : index
    %c0_61 = arith.constant 0 : index
    %c0_62 = arith.constant 0 : index
    %101 = vector.load %arg7[%c7, %c0_61, %c0_62] : memref<9x12x12xf32, #tpu.memory_space<vmem>>, vector<1x12x12xf32>
    %102 = vector.shape_cast %101 : vector<1x12x12xf32> to vector<12x12xf32>
    %cst_63 = arith.constant dense<0.000000e+00> : vector<12x256xf32>
    %103 = tpu.matmul %102, %100, %cst_63 {dimension_numbers = #tpu.dot_dimension_numbers<[1], [0], [0], [1], [0, 0, 1, 1], [], []>} : vector<12x12xf32>, vector<12x256xf32>, vector<12x256xf32> -> vector<12x256xf32>
    %104 = arith.addf %99, %103 : vector<12x256xf32>
    %c0_64 = arith.constant 0 : index
    %c145 = arith.constant 145 : index
    %105 = vector.load %arg10[%c0_64, %c145] : memref<12x512xf32, #tpu.memory_space<vmem>>, vector<12x256xf32>
    %cst_65 = arith.constant 0.000000e+00 : f32
    %106 = vector.shape_cast %25 : vector<1x256xi1> to vector<1x256xi1>
    %107 = vector.broadcast %106 : vector<1x256xi1> to vector<12x256xi1>
    %108 = vector.broadcast %cst_65 : f32 to vector<12x256xf32>
    %109 = arith.select %107, %105, %108 : vector<12x256xi1>, vector<12x256xf32>
    %c8 = arith.constant 8 : index
    %c0_66 = arith.constant 0 : index
    %c0_67 = arith.constant 0 : index
    %110 = vector.load %arg7[%c8, %c0_66, %c0_67] : memref<9x12x12xf32, #tpu.memory_space<vmem>>, vector<1x12x12xf32>
    %111 = vector.shape_cast %110 : vector<1x12x12xf32> to vector<12x12xf32>
    %cst_68 = arith.constant dense<0.000000e+00> : vector<12x256xf32>
    %112 = tpu.matmul %111, %109, %cst_68 {dimension_numbers = #tpu.dot_dimension_numbers<[1], [0], [0], [1], [0, 0, 1, 1], [], []>} : vector<12x12xf32>, vector<12x256xf32>, vector<12x256xf32> -> vector<12x256xf32>
    %113 = arith.addf %104, %112 : vector<12x256xf32>
    %114 = vector.broadcast %4 : vector<12x1xf32> to vector<12x256xf32>
    %115 = arith.addf %113, %114 : vector<12x256xf32>
    %c0_69 = arith.constant 0 : index
    %c0_70 = arith.constant 0 : index
    %c0_71 = arith.constant 0 : index
    %116 = vector.load %arg9[%c0_69, %c0_70, %c0_71] : memref<2x12x256xf32, #tpu.memory_space<vmem>>, vector<1x12x256xf32>
    %117 = vector.shape_cast %116 : vector<1x12x256xf32> to vector<12x256xf32>
    %118 = vector.shape_cast %115 : vector<12x256xf32> to vector<1x12x256xf32>
    tpu.vector_store %arg9[%c0_69, %c0_70, %c0_71], %118 {strides = array<i32>} : memref<2x12x256xf32, #tpu.memory_space<vmem>>, vector<1x12x256xf32>,
    %c1_72 = arith.constant 1 : index
    %c0_73 = arith.constant 0 : index
    %c0_74 = arith.constant 0 : index
    %119 = vector.load %arg1[%c1_72, %c0_73, %c0_74] : memref<2x4x256xf32, #tpu.memory_space<vmem>>, vector<1x4x256xf32>
    %120 = vector.shape_cast %119 : vector<1x4x256xf32> to vector<4x256xf32>
    %c1_75 = arith.constant 1 : index
    %c0_76 = arith.constant 0 : index
    %c0_77 = arith.constant 0 : index
    %121 = vector.load %arg2[%c1_75, %c0_76, %c0_77] : memref<2x4x256xf32, #tpu.memory_space<vmem>>, vector<1x4x256xf32>
    %122 = vector.shape_cast %121 : vector<1x4x256xf32> to vector<4x256xf32>
    %123 = tpu.concatenate %120, %122 in 0 : vector<4x256xf32>, vector<4x256xf32> -> vector<8x256xf32>
    %cst_78 = arith.constant dense<0.000000e+00> : vector<8x256xf32>
    %124 = tpu.matmul %0, %123, %cst_78 {dimension_numbers = #tpu.dot_dimension_numbers<[1], [0], [0], [1], [0, 0, 1, 1], [], []>} : vector<8x8xf32>, vector<8x256xf32>, vector<8x256xf32> -> vector<8x256xf32>
    %125 = vector.broadcast %1 : vector<8x1xf32> to vector<8x256xf32>
    %126 = arith.addf %124, %125 : vector<8x256xf32>
    %127 = vector.extract_strided_slice %126 {offsets = [0, 0], sizes = [4, 256], strides = [1, 1]} : vector<8x256xf32> to vector<4x256xf32>
    %128 = vector.extract_strided_slice %126 {offsets = [4, 0], sizes = [4, 256], strides = [1, 1]} : vector<8x256xf32> to vector<4x256xf32>
    %129 = arith.mulf %127, %128 : vector<4x256xf32>
    %cst_79 = arith.constant dense<0.000000e+00> : vector<12x256xf32>
    %130 = tpu.matmul %2, %129, %cst_79 {dimension_numbers = #tpu.dot_dimension_numbers<[1], [0], [0], [1], [0, 0, 1, 1], [], []>} : vector<12x4xf32>, vector<4x256xf32>, vector<12x256xf32> -> vector<12x256xf32>
    %131 = vector.broadcast %3 : vector<12x1xf32> to vector<12x256xf32>
    %132 = arith.addf %130, %131 : vector<12x256xf32>
    %c0_80 = arith.constant 0 : index
    %c128_81 = arith.constant 128 : index
    %133 = vector.load %arg10[%c0_80, %c128_81] : memref<12x512xf32, #tpu.memory_space<vmem>>, vector<12x256xf32>
    tpu.vector_store %arg10[%c0_80, %c128_81], %132 {strides = array<i32>} : memref<12x512xf32, #tpu.memory_space<vmem>>, vector<12x256xf32>,
    %cst_82 = arith.constant 0.000000e+00 : f32
    %134 = vector.broadcast %cst_82 : f32 to vector<12x256xf32>
    %c0_83 = arith.constant 0 : index
    %c111_84 = arith.constant 111 : index
    %135 = vector.load %arg10[%c0_83, %c111_84] : memref<12x512xf32, #tpu.memory_space<vmem>>, vector<12x256xf32>
    %cst_85 = arith.constant 0.000000e+00 : f32
    %136 = vector.shape_cast %23 : vector<1x256xi1> to vector<1x256xi1>
    %137 = vector.broadcast %136 : vector<1x256xi1> to vector<12x256xi1>
    %138 = vector.broadcast %cst_85 : f32 to vector<12x256xf32>
    %139 = arith.select %137, %135, %138 : vector<12x256xi1>, vector<12x256xf32>
    %c0_86 = arith.constant 0 : index
    %c0_87 = arith.constant 0 : index
    %c0_88 = arith.constant 0 : index
    %140 = vector.load %arg7[%c0_86, %c0_87, %c0_88] : memref<9x12x12xf32, #tpu.memory_space<vmem>>, vector<1x12x12xf32>
    %141 = vector.shape_cast %140 : vector<1x12x12xf32> to vector<12x12xf32>
    %cst_89 = arith.constant dense<0.000000e+00> : vector<12x256xf32>
    %142 = tpu.matmul %141, %139, %cst_89 {dimension_numbers = #tpu.dot_dimension_numbers<[1], [0], [0], [1], [0, 0, 1, 1], [], []>} : vector<12x12xf32>, vector<12x256xf32>, vector<12x256xf32> -> vector<12x256xf32>
    %143 = arith.addf %134, %142 : vector<12x256xf32>
    %c0_90 = arith.constant 0 : index
    %c112_91 = arith.constant 112 : index
    %144 = vector.load %arg10[%c0_90, %c112_91] : memref<12x512xf32, #tpu.memory_space<vmem>>, vector<12x256xf32>
    %c1_92 = arith.constant 1 : index
    %c0_93 = arith.constant 0 : index
    %c0_94 = arith.constant 0 : index
    %145 = vector.load %arg7[%c1_92, %c0_93, %c0_94] : memref<9x12x12xf32, #tpu.memory_space<vmem>>, vector<1x12x12xf32>
    %146 = vector.shape_cast %145 : vector<1x12x12xf32> to vector<12x12xf32>
    %cst_95 = arith.constant dense<0.000000e+00> : vector<12x256xf32>
    %147 = tpu.matmul %146, %144, %cst_95 {dimension_numbers = #tpu.dot_dimension_numbers<[1], [0], [0], [1], [0, 0, 1, 1], [], []>} : vector<12x12xf32>, vector<12x256xf32>, vector<12x256xf32> -> vector<12x256xf32>
    %148 = arith.addf %143, %147 : vector<12x256xf32>
    %c0_96 = arith.constant 0 : index
    %c113_97 = arith.constant 113 : index
    %149 = vector.load %arg10[%c0_96, %c113_97] : memref<12x512xf32, #tpu.memory_space<vmem>>, vector<12x256xf32>
    %cst_98 = arith.constant 0.000000e+00 : f32
    %150 = vector.shape_cast %25 : vector<1x256xi1> to vector<1x256xi1>
    %151 = vector.broadcast %150 : vector<1x256xi1> to vector<12x256xi1>
    %152 = vector.broadcast %cst_98 : f32 to vector<12x256xf32>
    %153 = arith.select %151, %149, %152 : vector<12x256xi1>, vector<12x256xf32>
    %c2_99 = arith.constant 2 : index
    %c0_100 = arith.constant 0 : index
    %c0_101 = arith.constant 0 : index
    %154 = vector.load %arg7[%c2_99, %c0_100, %c0_101] : memref<9x12x12xf32, #tpu.memory_space<vmem>>, vector<1x12x12xf32>
    %155 = vector.shape_cast %154 : vector<1x12x12xf32> to vector<12x12xf32>
    %cst_102 = arith.constant dense<0.000000e+00> : vector<12x256xf32>
    %156 = tpu.matmul %155, %153, %cst_102 {dimension_numbers = #tpu.dot_dimension_numbers<[1], [0], [0], [1], [0, 0, 1, 1], [], []>} : vector<12x12xf32>, vector<12x256xf32>, vector<12x256xf32> -> vector<12x256xf32>
    %157 = arith.addf %148, %156 : vector<12x256xf32>
    %c0_103 = arith.constant 0 : index
    %c127_104 = arith.constant 127 : index
    %158 = vector.load %arg10[%c0_103, %c127_104] : memref<12x512xf32, #tpu.memory_space<vmem>>, vector<12x256xf32>
    %cst_105 = arith.constant 0.000000e+00 : f32
    %159 = vector.shape_cast %23 : vector<1x256xi1> to vector<1x256xi1>
    %160 = vector.broadcast %159 : vector<1x256xi1> to vector<12x256xi1>
    %161 = vector.broadcast %cst_105 : f32 to vector<12x256xf32>
    %162 = arith.select %160, %158, %161 : vector<12x256xi1>, vector<12x256xf32>
    %c3_106 = arith.constant 3 : index
    %c0_107 = arith.constant 0 : index
    %c0_108 = arith.constant 0 : index
    %163 = vector.load %arg7[%c3_106, %c0_107, %c0_108] : memref<9x12x12xf32, #tpu.memory_space<vmem>>, vector<1x12x12xf32>
    %164 = vector.shape_cast %163 : vector<1x12x12xf32> to vector<12x12xf32>
    %cst_109 = arith.constant dense<0.000000e+00> : vector<12x256xf32>
    %165 = tpu.matmul %164, %162, %cst_109 {dimension_numbers = #tpu.dot_dimension_numbers<[1], [0], [0], [1], [0, 0, 1, 1], [], []>} : vector<12x12xf32>, vector<12x256xf32>, vector<12x256xf32> -> vector<12x256xf32>
    %166 = arith.addf %157, %165 : vector<12x256xf32>
    %c4_110 = arith.constant 4 : index
    %c0_111 = arith.constant 0 : index
    %c0_112 = arith.constant 0 : index
    %167 = vector.load %arg7[%c4_110, %c0_111, %c0_112] : memref<9x12x12xf32, #tpu.memory_space<vmem>>, vector<1x12x12xf32>
    %168 = vector.shape_cast %167 : vector<1x12x12xf32> to vector<12x12xf32>
    %cst_113 = arith.constant dense<0.000000e+00> : vector<12x256xf32>
    %169 = tpu.matmul %168, %132, %cst_113 {dimension_numbers = #tpu.dot_dimension_numbers<[1], [0], [0], [1], [0, 0, 1, 1], [], []>} : vector<12x12xf32>, vector<12x256xf32>, vector<12x256xf32> -> vector<12x256xf32>
    %170 = arith.addf %166, %169 : vector<12x256xf32>
    %c0_114 = arith.constant 0 : index
    %c129_115 = arith.constant 129 : index
    %171 = vector.load %arg10[%c0_114, %c129_115] : memref<12x512xf32, #tpu.memory_space<vmem>>, vector<12x256xf32>
    %cst_116 = arith.constant 0.000000e+00 : f32
    %172 = vector.shape_cast %25 : vector<1x256xi1> to vector<1x256xi1>
    %173 = vector.broadcast %172 : vector<1x256xi1> to vector<12x256xi1>
    %174 = vector.broadcast %cst_116 : f32 to vector<12x256xf32>
    %175 = arith.select %173, %171, %174 : vector<12x256xi1>, vector<12x256xf32>
    %c5_117 = arith.constant 5 : index
    %c0_118 = arith.constant 0 : index
    %c0_119 = arith.constant 0 : index
    %176 = vector.load %arg7[%c5_117, %c0_118, %c0_119] : memref<9x12x12xf32, #tpu.memory_space<vmem>>, vector<1x12x12xf32>
    %177 = vector.shape_cast %176 : vector<1x12x12xf32> to vector<12x12xf32>
    %cst_120 = arith.constant dense<0.000000e+00> : vector<12x256xf32>
    %178 = tpu.matmul %177, %175, %cst_120 {dimension_numbers = #tpu.dot_dimension_numbers<[1], [0], [0], [1], [0, 0, 1, 1], [], []>} : vector<12x12xf32>, vector<12x256xf32>, vector<12x256xf32> -> vector<12x256xf32>
    %179 = arith.addf %170, %178 : vector<12x256xf32>
    %c0_121 = arith.constant 0 : index
    %c143_122 = arith.constant 143 : index
    %180 = vector.load %arg10[%c0_121, %c143_122] : memref<12x512xf32, #tpu.memory_space<vmem>>, vector<12x256xf32>
    %cst_123 = arith.constant 0.000000e+00 : f32
    %181 = vector.shape_cast %23 : vector<1x256xi1> to vector<1x256xi1>
    %182 = vector.broadcast %181 : vector<1x256xi1> to vector<12x256xi1>
    %183 = vector.broadcast %cst_123 : f32 to vector<12x256xf32>
    %184 = arith.select %182, %180, %183 : vector<12x256xi1>, vector<12x256xf32>
    %c6_124 = arith.constant 6 : index
    %c0_125 = arith.constant 0 : index
    %c0_126 = arith.constant 0 : index
    %185 = vector.load %arg7[%c6_124, %c0_125, %c0_126] : memref<9x12x12xf32, #tpu.memory_space<vmem>>, vector<1x12x12xf32>
    %186 = vector.shape_cast %185 : vector<1x12x12xf32> to vector<12x12xf32>
    %cst_127 = arith.constant dense<0.000000e+00> : vector<12x256xf32>
    %187 = tpu.matmul %186, %184, %cst_127 {dimension_numbers = #tpu.dot_dimension_numbers<[1], [0], [0], [1], [0, 0, 1, 1], [], []>} : vector<12x12xf32>, vector<12x256xf32>, vector<12x256xf32> -> vector<12x256xf32>
    %188 = arith.addf %179, %187 : vector<12x256xf32>
    %c0_128 = arith.constant 0 : index
    %c144_129 = arith.constant 144 : index
    %189 = vector.load %arg10[%c0_128, %c144_129] : memref<12x512xf32, #tpu.memory_space<vmem>>, vector<12x256xf32>
    %c7_130 = arith.constant 7 : index
    %c0_131 = arith.constant 0 : index
    %c0_132 = arith.constant 0 : index
    %190 = vector.load %arg7[%c7_130, %c0_131, %c0_132] : memref<9x12x12xf32, #tpu.memory_space<vmem>>, vector<1x12x12xf32>
    %191 = vector.shape_cast %190 : vector<1x12x12xf32> to vector<12x12xf32>
    %cst_133 = arith.constant dense<0.000000e+00> : vector<12x256xf32>
    %192 = tpu.matmul %191, %189, %cst_133 {dimension_numbers = #tpu.dot_dimension_numbers<[1], [0], [0], [1], [0, 0, 1, 1], [], []>} : vector<12x12xf32>, vector<12x256xf32>, vector<12x256xf32> -> vector<12x256xf32>
    %193 = arith.addf %188, %192 : vector<12x256xf32>
    %c0_134 = arith.constant 0 : index
    %c145_135 = arith.constant 145 : index
    %194 = vector.load %arg10[%c0_134, %c145_135] : memref<12x512xf32, #tpu.memory_space<vmem>>, vector<12x256xf32>
    %cst_136 = arith.constant 0.000000e+00 : f32
    %195 = vector.shape_cast %25 : vector<1x256xi1> to vector<1x256xi1>
    %196 = vector.broadcast %195 : vector<1x256xi1> to vector<12x256xi1>
    %197 = vector.broadcast %cst_136 : f32 to vector<12x256xf32>
    %198 = arith.select %196, %194, %197 : vector<12x256xi1>, vector<12x256xf32>
    %c8_137 = arith.constant 8 : index
    %c0_138 = arith.constant 0 : index
    %c0_139 = arith.constant 0 : index
    %199 = vector.load %arg7[%c8_137, %c0_138, %c0_139] : memref<9x12x12xf32, #tpu.memory_space<vmem>>, vector<1x12x12xf32>
    %200 = vector.shape_cast %199 : vector<1x12x12xf32> to vector<12x12xf32>
    %cst_140 = arith.constant dense<0.000000e+00> : vector<12x256xf32>
    %201 = tpu.matmul %200, %198, %cst_140 {dimension_numbers = #tpu.dot_dimension_numbers<[1], [0], [0], [1], [0, 0, 1, 1], [], []>} : vector<12x12xf32>, vector<12x256xf32>, vector<12x256xf32> -> vector<12x256xf32>
    %202 = arith.addf %193, %201 : vector<12x256xf32>
    %203 = vector.broadcast %4 : vector<12x1xf32> to vector<12x256xf32>
    %204 = arith.addf %202, %203 : vector<12x256xf32>
    %c1_141 = arith.constant 1 : index
    %c0_142 = arith.constant 0 : index
    %c0_143 = arith.constant 0 : index
    %205 = vector.load %arg9[%c1_141, %c0_142, %c0_143] : memref<2x12x256xf32, #tpu.memory_space<vmem>>, vector<1x12x256xf32>
    %206 = vector.shape_cast %205 : vector<1x12x256xf32> to vector<12x256xf32>
    %207 = vector.shape_cast %204 : vector<12x256xf32> to vector<1x12x256xf32>
    tpu.vector_store %arg9[%c1_141, %c0_142, %c0_143], %207 {strides = array<i32>} : memref<2x12x256xf32, #tpu.memory_space<vmem>>, vector<1x12x256xf32>,
    return
  }
  func.func @transform_0(%arg0: i32) -> (i32, i32, i32) {
    %c0_i32 = arith.constant 0 : i32
    %c0_i32_0 = arith.constant 0 : i32
    %c0_i32_1 = arith.constant 0 : i32
    return %arg0, %c0_i32, %c0_i32_0 : i32, i32, i32
  }
  func.func @transform_1(%arg0: i32) -> (i32, i32, i32) {
    %c0_i32 = arith.constant 0 : i32
    %c0_i32_0 = arith.constant 0 : i32
    %c0_i32_1 = arith.constant 0 : i32
    return %arg0, %c0_i32, %c0_i32_0 : i32, i32, i32
  }
  func.func @transform_2(%arg0: i32) -> (i32, i32) {
    %c0_i32 = arith.constant 0 : i32
    %c0_i32_0 = arith.constant 0 : i32
    %c0_i32_1 = arith.constant 0 : i32
    return %c0_i32, %c0_i32_0 : i32, i32
  }
  func.func @transform_3(%arg0: i32) -> (i32, i32) {
    %c0_i32 = arith.constant 0 : i32
    %c0_i32_0 = arith.constant 0 : i32
    %c0_i32_1 = arith.constant 0 : i32
    return %c0_i32, %c0_i32_0 : i32, i32
  }
  func.func @transform_4(%arg0: i32) -> (i32, i32) {
    %c0_i32 = arith.constant 0 : i32
    %c0_i32_0 = arith.constant 0 : i32
    %c0_i32_1 = arith.constant 0 : i32
    return %c0_i32, %c0_i32_0 : i32, i32
  }
  func.func @transform_5(%arg0: i32) -> (i32, i32) {
    %c0_i32 = arith.constant 0 : i32
    %c0_i32_0 = arith.constant 0 : i32
    %c0_i32_1 = arith.constant 0 : i32
    return %c0_i32, %c0_i32_0 : i32, i32
  }
  func.func @transform_6(%arg0: i32) -> (i32, i32, i32) {
    %c0_i32 = arith.constant 0 : i32
    %c0_i32_0 = arith.constant 0 : i32
    %c0_i32_1 = arith.constant 0 : i32
    %c0_i32_2 = arith.constant 0 : i32
    return %c0_i32, %c0_i32_0, %c0_i32_1 : i32, i32, i32
  }
  func.func @transform_7(%arg0: i32) -> (i32, i32) {
    %c0_i32 = arith.constant 0 : i32
    %c0_i32_0 = arith.constant 0 : i32
    %c0_i32_1 = arith.constant 0 : i32
    return %c0_i32, %c0_i32_0 : i32, i32
  }
  func.func @transform_8(%arg0: i32) -> (i32, i32, i32) {
    %c0_i32 = arith.constant 0 : i32
    %c0_i32_0 = arith.constant 0 : i32
    %c0_i32_1 = arith.constant 0 : i32
    return %arg0, %c0_i32, %c0_i32_0 : i32, i32, i32
  }
}

</mosaic_0001>

<llo_original>
// kernel: tpu_custom_call.1
$region0: #{tpu_custom_call.1}
  #allocation0 [shape = 'u32[]', space=smem, size = 0x4, offset = 0x4, fixed_abs, tag = 'smem constant byte address 0x4 - core index']
  #allocation1 [shape = 'u32[144,128]{1,0:T(1,128)}', space=vmem, size = 0x12000, scoped, tag = 'internal scratch']
  #allocation2 [shape = 'f32[12,512]{1,0:T(8,128)}', space=vmem, size = 0x8000, scoped, tag = 'scratch operand']
  %s0 = inlined_call_operand.vmem [shape: f32[2,4,256], index: 0, kind: input, shape index: {}]
  %s1 = inlined_call_operand.vmem [shape: f32[2,4,256], index: 1, kind: input, shape index: {}]
  %s2 = inlined_call_operand.vmem [shape: f32[8,8], index: 2, kind: input, shape index: {}]
  %s3 = inlined_call_operand.vmem [shape: f32[8,1], index: 3, kind: input, shape index: {}]
  %s4 = inlined_call_operand.vmem [shape: f32[12,4], index: 4, kind: input, shape index: {}]
  %s5 = inlined_call_operand.vmem [shape: f32[12,1], index: 5, kind: input, shape index: {}]
  %s6 = inlined_call_operand.hbm [shape: f32[9,12,12], index: 6, kind: input, shape index: {}]
  %s7 = inlined_call_operand.vmem [shape: f32[12,1], index: 7, kind: input, shape index: {}]
  %s8 = inlined_call_operand.vmem [shape: f32[2,12,256], index: 8, kind: output, shape index: {}]
  %s9 = sld [smem:[#allocation0]]
  $region46: #{tpu_custom_call.1} parent=0
    _
  %s11 = ssub.s32 1, %s9
  %s12 = scalar_select 0, %s11, %s9
  $region1: #{tpu_custom_call.1} parent=0
    #allocation3 [shape = 'u8[73728]{0}', space=vmem, size = 0x12000, scoped, tag = 'input window, operand 6, single buffered']
    #allocation4 [shape = 's32[1]{0}', space=sflag, size = 0x4, scoped, tag = 'scoped memory for tpu_custom_call.1']
    %13 = vsyncpa [#allocation4], 0
    // Predicated region
    $region2: #{tpu_custom_call.1} parent=1 // pred_check
      _
    $region3: #{tpu_custom_call.1} parent=1 // pred_check_branch
      %15 = sbr.rel (0) target = $region5
    $region4: #{tpu_custom_call.1} parent=1 // pred_region
      _
    $region5: #{tpu_custom_call.1} parent=1 // pred_fallthru
      _
    // Predicated region
    $region6: #{tpu_custom_call.1} parent=1 // pred_check
      _
    $region7: #{tpu_custom_call.1} parent=1 // pred_check_branch
      %17 = sbr.rel (0) target = $region9
    $region8: #{tpu_custom_call.1} parent=1 // pred_region
      _
    $region9: #{tpu_custom_call.1} parent=1 // pred_fallthru
      _
    // Predicated region
    $region10: #{tpu_custom_call.1} parent=1 // pred_check
      _
    $region11: #{tpu_custom_call.1} parent=1 // pred_check_branch
      %19 = sbr.rel (0) target = $region13
    $region12: #{tpu_custom_call.1} parent=1 // pred_region
      _
    $region13: #{tpu_custom_call.1} parent=1 // pred_fallthru
      _
    // Predicated region
    $region14: #{tpu_custom_call.1} parent=1 // pred_check
      _
    $region15: #{tpu_custom_call.1} parent=1 // pred_check_branch
      %21 = sbr.rel (0) target = $region17
    $region16: #{tpu_custom_call.1} parent=1 // pred_region
      _
    $region17: #{tpu_custom_call.1} parent=1 // pred_fallthru
      _
    // Predicated region
    $region18: #{tpu_custom_call.1} parent=1 // pred_check
      _
    $region19: #{tpu_custom_call.1} parent=1 // pred_check_branch
      %23 = sbr.rel (0) target = $region21
    $region20: #{tpu_custom_call.1} parent=1 // pred_region
      _
    $region21: #{tpu_custom_call.1} parent=1 // pred_fallthru
      _
    // Predicated region
    $region22: #{tpu_custom_call.1} parent=1 // pred_check
      _
    $region23: #{tpu_custom_call.1} parent=1 // pred_check_branch
      %25 = sbr.rel (0) target = $region25
    $region24: #{tpu_custom_call.1} parent=1 // pred_region
      _
    $region25: #{tpu_custom_call.1} parent=1 // pred_fallthru
      _
    // Predicated region
    $region26: #{tpu_custom_call.1} parent=1 // pred_check
      _
    $region27: #{tpu_custom_call.1} parent=1 // pred_check_branch
      %27 = sbr.rel (0) target = $region29
    $region28: #{tpu_custom_call.1} parent=1 // pred_region
      %s29 = ssub.s32 2304, 2304
      %30 = vsyncadd [#allocation4], %s29
      %s31 = sshll.u32 [#allocation3], 4
      %s32 = int_to_ptr.vmem [resolvable:$true] %s31
      %37 = dma.hbm_to_vmem [thread:$0]  %s6, 2304, %s32, [#allocation4], 128, 128, 8
    $region29: #{tpu_custom_call.1} parent=1 // pred_fallthru
      _
    // Predicated region
    $region30: #{tpu_custom_call.1} parent=1 // pred_check
      _
    $region31: #{tpu_custom_call.1} parent=1 // pred_check_branch
      %39 = sbr.rel (0) target = $region33
    $region32: #{tpu_custom_call.1} parent=1 // pred_region
      _
    $region33: #{tpu_custom_call.1} parent=1 // pred_fallthru
      _
    // Predicated region
    $region34: #{tpu_custom_call.1} parent=1 // pred_check
      _
    $region35: #{tpu_custom_call.1} parent=1 // pred_check_branch
      %41 = sbr.rel (0) target = $region37
    $region36: #{tpu_custom_call.1} parent=1 // pred_region
      %42 = dma.done [#allocation4], 2304
    $region37: #{tpu_custom_call.1} parent=1 // pred_fallthru
      _
    %v43 = vld [vmem:[%s2] sm:$0xff]
    %v44 = vld [vmem:[%s3] sm:$0xff]
    %v45 = vld [vmem:[%s4] sm:$0xff]
    %v46 = vld [vmem:[%s4 + $0x8] sm:$0xf]
    %v47 = vld [vmem:[%s5] sm:$0xff]
    %v48 = vld [vmem:[%s5 + $0x8] sm:$0xf]
    %v49 = vld [vmem:[%s7] sm:$0xff]
    %v50 = vld [vmem:[%s7 + $0x8] sm:$0xf]
    %v51 = vlaneseq
    %v52 = vand.u32 %v51, 127
    %v53 = vadd.s32 %v52, 128
    %vm54 = vcmp.lt.s32.totalorder %v52, 0
    %v55 = vsub.s32 0, %v52
    %v56 = vsel %vm54, %v55, %v52
    %v57 = vshrl.u32 %v56, 4
    %v58 = vand.u32 %v56, 15
    %v59 = vsub.s32 0, %v58
    %v60 = vsel %vm54, %v59, %v58
    %vm61 = vcmp.lt.s32.totalorder %v53, 0
    %v62 = vsub.s32 0, %v53
    %v63 = vsel %vm61, %v62, %v53
    %v64 = vshrl.u32 %v63, 4
    %v65 = vand.u32 %v63, 15
    %v66 = vsub.s32 0, %v65
    %v67 = vsel %vm61, %v66, %v65
    %vm68 = vcmp.ne.s32.totalorder %v60, 0
    %vm69 = vcmp.ne.s32.totalorder %v67, 0
    %vm70 = vcmp.lt.s32.totalorder %v60, 0
    %vm71 = vcmp.lt.s32.totalorder %v67, 0
    %vm72 = vmand %vm70, %vm68
    %vm73 = vmand %vm71, %vm69
    %v74 = vadd.s32 %v60, 16
    %v75 = vadd.s32 %v67, 16
    %v76 = vsel %vm72, %v74, %v60
    %v77 = vsel %vm73, %v75, %v67
    %vm78 = vcmp.ge.s32.totalorder %v76, 1
    %vm79 = vcmp.ge.s32.totalorder %v77, 1
    %vm80 = vcmp.le.s32.totalorder %v76, 14
    %vm81 = vcmp.le.s32.totalorder %v77, 14
    %82 = vst [vmem:[#allocation2] sm:$0xff] 0.0
    %83 = vst [vmem:[#allocation2 + $0x20] sm:$0xf] 0.0
    %84 = vst [vmem:[#allocation2 + $0x18] sm:$0xff] 0.0
    %85 = vst [vmem:[#allocation2 + $0x38] sm:$0xf] 0.0
    %v86 = vld [vmem:[%s0] sm:$0xff]
    %v87 = vld [vmem:[%s1] sm:$0xff]
    %v89 = vcombine.high %v86, %v86
    %v92 = vcombine.low %v87, %v87
    %vm94 = vcmask 1043456
    %v95 = vsel %vm94, %v86, %v92
    %v96 = vsel %vm94, %v89, %v87
    %98 = vset.pattern.permute.xlu0 0
    %99 = vperm.xlu0 %98, %v44
    %v100 = vpop.permute.xlu0 %99
    %vm102 = vcmask 64512
    %v104 = vsel %vm102, %v43, 0
    %106 = vmatprep.subr.mxu0 0.0
    %107 = vmatpush1.msra.mxu0 0.0
    %108 = vmatprep.subr.mxu0 0.0
    %109 = vmatpush1.msra.mxu0 0.0
    %110 = vmatprep.subr.mxu0 0.0
    %111 = vmatpush1.msra.mxu0 0.0
    %112 = vmatprep.subr.mxu0 0.0
    %113 = vmatpush1.msra.mxu0 0.0
    %114 = vmatprep.subr.mxu0 0.0
    %115 = vmatpush1.msra.mxu0 0.0
    %116 = vmatprep.subr.mxu0 0.0
    %117 = vmatpush1.msra.mxu0 0.0
    %118 = vmatprep.subr.mxu0 0.0
    %119 = vmatpush1.msra.mxu0 0.0
    %120 = vmatprep.subr.mxu0 0.0
    %121 = vmatpush1.msra.mxu0 0.0
    %122 = vmatprep.subr.mxu0 0.0
    %123 = vmatpush1.msra.mxu0 0.0
    %124 = vmatprep.subr.mxu0 0.0
    %125 = vmatpush1.msra.mxu0 0.0
    %126 = vmatprep.subr.mxu0 0.0
    %127 = vmatpush1.msra.mxu0 0.0
    %128 = vmatprep.subr.mxu0 0.0
    %129 = vmatpush1.msra.mxu0 0.0
    %130 = vmatprep.subr.mxu0 0.0
    %131 = vmatpush1.msra.mxu0 0.0
    %132 = vmatprep.subr.mxu0 0.0
    %133 = vmatpush1.msra.mxu0 0.0
    %134 = vmatprep.subr.mxu0 0.0
    %135 = vmatpush1.msra.mxu0 0.0
    %136 = vmatprep.subr.mxu0 %v96
    %137 = vmatpush1.msra.mxu0 %v95
    %138 = vmatprep.subr.mxu0 0.0
    %139 = vmatpush2.msra.mxu0 0.0
    %140 = vmatprep.subr.mxu0 0.0
    %141 = vmatpush2.msra.mxu0 0.0
    %142 = vmatprep.subr.mxu0 0.0
    %143 = vmatpush2.msra.mxu0 0.0
    %144 = vmatprep.subr.mxu0 0.0
    %145 = vmatpush2.msra.mxu0 0.0
    %146 = vmatprep.subr.mxu0 0.0
    %147 = vmatpush2.msra.mxu0 0.0
    %148 = vmatprep.subr.mxu0 0.0
    %149 = vmatpush2.msra.mxu0 0.0
    %150 = vmatprep.subr.mxu0 0.0
    %151 = vmatpush2.msra.mxu0 0.0
    %152 = vmatprep.subr.mxu0 0.0
    %153 = vmatpush2.msra.mxu0 0.0
    %154 = vmatprep.subr.mxu0 0.0
    %155 = vmatpush2.msra.mxu0 0.0
    %156 = vmatprep.subr.mxu0 0.0
    %157 = vmatpush2.msra.mxu0 0.0
    %158 = vmatprep.subr.mxu0 0.0
    %159 = vmatpush2.msra.mxu0 0.0
    %160 = vmatprep.subr.mxu0 0.0
    %161 = vmatpush2.msra.mxu0 0.0
    %162 = vmatprep.subr.mxu0 0.0
    %163 = vmatpush2.msra.mxu0 0.0
    %164 = vmatprep.subr.mxu0 0.0
    %165 = vmatpush2.msra.mxu0 0.0
    %166 = vmatprep.subr.mxu0 0.0
    %167 = vmatpush2.msra.mxu0 0.0
    %168 = vmatprep.subr.mxu0 0.0
    %169 = vmatpush2.msra.mxu0 0.0
    %170 = vmatprep.mubr.f32.mxu0 0.0
    %171 = vmatmul.mubr.f32.gmra.mxu0 %v104
    %v172 = vpop.f32.mrf.mxu0
    %v173 = vadd.f32 %v100, %v172
    %v174 = vpop.f32.mrf.mxu0
    %v175 = vadd.f32 %v100, %v174
    %176 = vdwg.mxu0
    %v179 = vrot.slane %v173, 4
    %v180 = vrot.slane %v175, 4
    %v183 = vmul.f32 %v173, %v179
    %v184 = vmul.f32 %v175, %v180
    %186 = vset.pattern.permute.xlu0 0
    %187 = vperm.xlu0 %186, %v47
    %v188 = vpop.permute.xlu0 %187
    %191 = vset.pattern.permute.xlu0 0
    %192 = vperm.xlu0 %191, %v48
    %v193 = vpop.permute.xlu0 %192
    %vm195 = vcmask 31744
    %v197 = vsel %vm195, %v45, 0
    %v200 = vsel %vm195, %v46, 0
    %v203 = vsel %vm94, %v183, 0
    %v206 = vsel %vm94, %v184, 0
    %208 = vmatprep.subr.mxu0 0.0
    %209 = vmatpush1.msra.mxu0 0.0
    %210 = vmatprep.subr.mxu0 0.0
    %211 = vmatpush1.msra.mxu0 0.0
    %212 = vmatprep.subr.mxu0 0.0
    %213 = vmatpush1.msra.mxu0 0.0
    %214 = vmatprep.subr.mxu0 0.0
    %215 = vmatpush1.msra.mxu0 0.0
    %216 = vmatprep.subr.mxu0 0.0
    %217 = vmatpush1.msra.mxu0 0.0
    %218 = vmatprep.subr.mxu0 0.0
    %219 = vmatpush1.msra.mxu0 0.0
    %220 = vmatprep.subr.mxu0 0.0
    %221 = vmatpush1.msra.mxu0 0.0
    %222 = vmatprep.subr.mxu0 0.0
    %223 = vmatpush1.msra.mxu0 0.0
    %224 = vmatprep.subr.mxu0 0.0
    %225 = vmatpush1.msra.mxu0 0.0
    %226 = vmatprep.subr.mxu0 0.0
    %227 = vmatpush1.msra.mxu0 0.0
    %228 = vmatprep.subr.mxu0 0.0
    %229 = vmatpush1.msra.mxu0 0.0
    %230 = vmatprep.subr.mxu0 0.0
    %231 = vmatpush1.msra.mxu0 0.0
    %232 = vmatprep.subr.mxu0 0.0
    %233 = vmatpush1.msra.mxu0 0.0
    %234 = vmatprep.subr.mxu0 0.0
    %235 = vmatpush1.msra.mxu0 0.0
    %236 = vmatprep.subr.mxu0 0.0
    %237 = vmatpush1.msra.mxu0 0.0
    %238 = vmatprep.subr.mxu0 %v206
    %239 = vmatpush1.msra.mxu0 %v203
    %240 = vmatprep.subr.mxu0 0.0
    %241 = vmatpush2.msra.mxu0 0.0
    %242 = vmatprep.subr.mxu0 0.0
    %243 = vmatpush2.msra.mxu0 0.0
    %244 = vmatprep.subr.mxu0 0.0
    %245 = vmatpush2.msra.mxu0 0.0
    %246 = vmatprep.subr.mxu0 0.0
    %247 = vmatpush2.msra.mxu0 0.0
    %248 = vmatprep.subr.mxu0 0.0
    %249 = vmatpush2.msra.mxu0 0.0
    %250 = vmatprep.subr.mxu0 0.0
    %251 = vmatpush2.msra.mxu0 0.0
    %252 = vmatprep.subr.mxu0 0.0
    %253 = vmatpush2.msra.mxu0 0.0
    %254 = vmatprep.subr.mxu0 0.0
    %255 = vmatpush2.msra.mxu0 0.0
    %256 = vmatprep.subr.mxu0 0.0
    %257 = vmatpush2.msra.mxu0 0.0
    %258 = vmatprep.subr.mxu0 0.0
    %259 = vmatpush2.msra.mxu0 0.0
    %260 = vmatprep.subr.mxu0 0.0
    %261 = vmatpush2.msra.mxu0 0.0
    %262 = vmatprep.subr.mxu0 0.0
    %263 = vmatpush2.msra.mxu0 0.0
    %264 = vmatprep.subr.mxu0 0.0
    %265 = vmatpush2.msra.mxu0 0.0
    %266 = vmatprep.subr.mxu0 0.0
    %267 = vmatpush2.msra.mxu0 0.0
    %268 = vmatprep.subr.mxu0 0.0
    %269 = vmatpush2.msra.mxu0 0.0
    %270 = vmatprep.subr.mxu0 0.0
    %271 = vmatpush2.msra.mxu0 0.0
    %272 = vmatprep.mubr.f32.mxu0 0.0
    %273 = vmatmul.mubr.f32.gmra.mxu0 %v197
    %v274 = vpop.f32.mrf.mxu0
    %v275 = vadd.f32 %v188, %v274
    %v276 = vpop.f32.mrf.mxu0
    %v277 = vadd.f32 %v188, %v276
    %278 = vmatprep.mubr.f32.mxu0 0.0
    %279 = vmatmul.mubr.f32.gmra.mxu0 %v200
    %v280 = vpop.f32.mrf.mxu0
    %v281 = vadd.f32 %v193, %v280
    %v282 = vpop.f32.mrf.mxu0
    %v283 = vadd.f32 %v193, %v282
    %284 = vdwg.mxu0
    %285 = vst [vmem:[#allocation2 + $0x8] sm:$0xff] %v275
    %286 = vst [vmem:[#allocation2 + $0x10] sm:$0xff] %v277
    %287 = vst [vmem:[#allocation2 + $0x28] sm:$0xf] %v281
    %288 = vst [vmem:[#allocation2 + $0x30] sm:$0xf] %v283
    %v289 = vld [vmem:[#allocation2] sm:$0xff]
    %v290 = vld [vmem:[#allocation2 + $0x8] sm:$0xff]
    %v291 = vld [vmem:[#allocation2 + $0x10] sm:$0xff]
    %v292 = vld [vmem:[#allocation2 + $0x20] sm:$0xf]
    %v293 = vld [vmem:[#allocation2 + $0x28] sm:$0xf]
    %v294 = vld [vmem:[#allocation2 + $0x30] sm:$0xf]
    %v295 = vsel %vm78, 1, 0
    %v296 = vsel %vm79, 1, 0
    %vm297 = vcmp.eq.s32.totalorder %v295, 1
    %vm298 = vcmp.eq.s32.totalorder %v296, 1
    %305 = vrot.lane.b32.xlu0 %v289, 17
    %v306 = vpop.permute.xlu0 %305
    %307 = vrot.lane.b32.xlu0 %v290, 17
    %v308 = vpop.permute.xlu0 %307
    %309 = vrot.lane.b32.xlu0 %v291, 17
    %v310 = vpop.permute.xlu0 %309
    %311 = vrot.lane.b32.xlu0 %v292, 17
    %v312 = vpop.permute.xlu0 %311
    %313 = vrot.lane.b32.xlu0 %v293, 17
    %v314 = vpop.permute.xlu0 %313
    %315 = vrot.lane.b32.xlu0 %v294, 17
    %v316 = vpop.permute.xlu0 %315
    %vm317 = vcmask 138240
    %v318 = vsel %vm317, %v306, %v308
    %v319 = vsel %vm317, %v308, %v310
    %v320 = vsel %vm317, %v312, %v314
    %v321 = vsel %vm317, %v314, %v316
    %v326 = vsel %vm297, %v318, 0.0
    %v327 = vsel %vm298, %v319, 0.0
    %v328 = vsel %vm297, %v320, 0.0
    %v329 = vsel %vm298, %v321, 0.0
    %v330 = vld [vmem:[#allocation3] sm:$0xff]
    %v331 = vld [vmem:[#allocation3 + $0x8] sm:$0xf]
    %s332 = scalar_lea.vmem [#allocation3], 16
    %v333 = vld [vmem:[%s332] sm:$0xff]
    %v334 = vld [vmem:[%s332 + $0x8] sm:$0xf]
    %335 = vrot.lane.b32.xlu0 %v289, 16
    %v336 = vpop.permute.xlu0 %335
    %337 = vrot.lane.b32.xlu0 %v290, 16
    %v338 = vpop.permute.xlu0 %337
    %339 = vrot.lane.b32.xlu0 %v291, 16
    %v340 = vpop.permute.xlu0 %339
    %341 = vrot.lane.b32.xlu0 %v292, 16
    %v342 = vpop.permute.xlu0 %341
    %343 = vrot.lane.b32.xlu0 %v293, 16
    %v344 = vpop.permute.xlu0 %343
    %345 = vrot.lane.b32.xlu0 %v294, 16
    %v346 = vpop.permute.xlu0 %345
    %vm347 = vcmask 130048
    %v348 = vsel %vm347, %v336, %v338
    %v349 = vsel %vm347, %v338, %v340
    %v350 = vsel %vm347, %v342, %v344
    %v351 = vsel %vm347, %v344, %v346
    %vm354 = vcmask 97280
    %v356 = vsel %vm354, %v333, 0
    %v359 = vsel %vm354, %v334, 0
    %v361 = vsel %vm94, %v350, 0
    %v363 = vsel %vm94, %v351, 0
    %365 = vmatprep.subr.mxu0 0.0
    %366 = vmatpush1.msra.mxu0 0.0
    %367 = vmatprep.subr.mxu0 0.0
    %368 = vmatpush1.msra.mxu0 0.0
    %369 = vmatprep.subr.mxu0 0.0
    %370 = vmatpush1.msra.mxu0 0.0
    %371 = vmatprep.subr.mxu0 0.0
    %372 = vmatpush1.msra.mxu0 0.0
    %373 = vmatprep.subr.mxu0 0.0
    %374 = vmatpush1.msra.mxu0 0.0
    %375 = vmatprep.subr.mxu0 0.0
    %376 = vmatpush1.msra.mxu0 0.0
    %377 = vmatprep.subr.mxu0 0.0
    %378 = vmatpush1.msra.mxu0 0.0
    %379 = vmatprep.subr.mxu0 0.0
    %380 = vmatpush1.msra.mxu0 0.0
    %381 = vmatprep.subr.mxu0 0.0
    %382 = vmatpush1.msra.mxu0 0.0
    %383 = vmatprep.subr.mxu0 0.0
    %384 = vmatpush1.msra.mxu0 0.0
    %385 = vmatprep.subr.mxu0 0.0
    %386 = vmatpush1.msra.mxu0 0.0
    %387 = vmatprep.subr.mxu0 0.0
    %388 = vmatpush1.msra.mxu0 0.0
    %389 = vmatprep.subr.mxu0 0.0
    %390 = vmatpush1.msra.mxu0 0.0
    %391 = vmatprep.subr.mxu0 0.0
    %392 = vmatpush1.msra.mxu0 0.0
    %393 = vmatprep.subr.mxu0 %v363
    %394 = vmatpush1.msra.mxu0 %v361
    %395 = vmatprep.subr.mxu0 %v349
    %396 = vmatpush1.msra.mxu0 %v348
    %397 = vmatprep.subr.mxu0 0.0
    %398 = vmatpush2.msra.mxu0 0.0
    %399 = vmatprep.subr.mxu0 0.0
    %400 = vmatpush2.msra.mxu0 0.0
    %401 = vmatprep.subr.mxu0 0.0
    %402 = vmatpush2.msra.mxu0 0.0
    %403 = vmatprep.subr.mxu0 0.0
    %404 = vmatpush2.msra.mxu0 0.0
    %405 = vmatprep.subr.mxu0 0.0
    %406 = vmatpush2.msra.mxu0 0.0
    %407 = vmatprep.subr.mxu0 0.0
    %408 = vmatpush2.msra.mxu0 0.0
    %409 = vmatprep.subr.mxu0 0.0
    %410 = vmatpush2.msra.mxu0 0.0
    %411 = vmatprep.subr.mxu0 0.0
    %412 = vmatpush2.msra.mxu0 0.0
    %413 = vmatprep.subr.mxu0 0.0
    %414 = vmatpush2.msra.mxu0 0.0
    %415 = vmatprep.subr.mxu0 0.0
    %416 = vmatpush2.msra.mxu0 0.0
    %417 = vmatprep.subr.mxu0 0.0
    %418 = vmatpush2.msra.mxu0 0.0
    %419 = vmatprep.subr.mxu0 0.0
    %420 = vmatpush2.msra.mxu0 0.0
    %421 = vmatprep.subr.mxu0 0.0
    %422 = vmatpush2.msra.mxu0 0.0
    %423 = vmatprep.subr.mxu0 0.0
    %424 = vmatpush2.msra.mxu0 0.0
    %425 = vmatprep.subr.mxu0 0.0
    %426 = vmatpush2.msra.mxu0 0.0
    %427 = vmatprep.subr.mxu0 0.0
    %428 = vmatpush2.msra.mxu0 0.0
    %429 = vmatprep.mubr.f32.mxu0 0.0
    %430 = vmatmul.mubr.f32.gmra.mxu0 %v356
    %v431 = vpop.f32.mrf.mxu0
    %v432 = vadd.f32 0.0, %v431
    %v433 = vpop.f32.mrf.mxu0
    %v434 = vadd.f32 0.0, %v433
    %435 = vmatprep.mubr.f32.mxu0 0.0
    %436 = vmatmul.mubr.f32.gmra.mxu0 %v359
    %v437 = vpop.f32.mrf.mxu0
    %v438 = vadd.f32 0.0, %v437
    %v439 = vpop.f32.mrf.mxu0
    %v440 = vadd.f32 0.0, %v439
    %441 = vdwg.mxu0
    %v443 = vsel %vm354, %v330, 0
    %v446 = vsel %vm354, %v331, 0
    %v449 = vsel %vm94, %v328, 0
    %v452 = vsel %vm94, %v329, 0
    %454 = vmatprep.subr.mxu0 0.0
    %455 = vmatpush1.msra.mxu0 0.0
    %456 = vmatprep.subr.mxu0 0.0
    %457 = vmatpush1.msra.mxu0 0.0
    %458 = vmatprep.subr.mxu0 0.0
    %459 = vmatpush1.msra.mxu0 0.0
    %460 = vmatprep.subr.mxu0 0.0
    %461 = vmatpush1.msra.mxu0 0.0
    %462 = vmatprep.subr.mxu0 0.0
    %463 = vmatpush1.msra.mxu0 0.0
    %464 = vmatprep.subr.mxu0 0.0
    %465 = vmatpush1.msra.mxu0 0.0
    %466 = vmatprep.subr.mxu0 0.0
    %467 = vmatpush1.msra.mxu0 0.0
    %468 = vmatprep.subr.mxu0 0.0
    %469 = vmatpush1.msra.mxu0 0.0
    %470 = vmatprep.subr.mxu0 0.0
    %471 = vmatpush1.msra.mxu0 0.0
    %472 = vmatprep.subr.mxu0 0.0
    %473 = vmatpush1.msra.mxu0 0.0
    %474 = vmatprep.subr.mxu0 0.0
    %475 = vmatpush1.msra.mxu0 0.0
    %476 = vmatprep.subr.mxu0 0.0
    %477 = vmatpush1.msra.mxu0 0.0
    %478 = vmatprep.subr.mxu0 0.0
    %479 = vmatpush1.msra.mxu0 0.0
    %480 = vmatprep.subr.mxu0 0.0
    %481 = vmatpush1.msra.mxu0 0.0
    %482 = vmatprep.subr.mxu0 %v452
    %483 = vmatpush1.msra.mxu0 %v449
    %484 = vmatprep.subr.mxu0 %v327
    %485 = vmatpush1.msra.mxu0 %v326
    %486 = vmatprep.subr.mxu0 0.0
    %487 = vmatpush2.msra.mxu0 0.0
    %488 = vmatprep.subr.mxu0 0.0
    %489 = vmatpush2.msra.mxu0 0.0
    %490 = vmatprep.subr.mxu0 0.0
    %491 = vmatpush2.msra.mxu0 0.0
    %492 = vmatprep.subr.mxu0 0.0
    %493 = vmatpush2.msra.mxu0 0.0
    %494 = vmatprep.subr.mxu0 0.0
    %495 = vmatpush2.msra.mxu0 0.0
    %496 = vmatprep.subr.mxu0 0.0
    %497 = vmatpush2.msra.mxu0 0.0
    %498 = vmatprep.subr.mxu0 0.0
    %499 = vmatpush2.msra.mxu0 0.0
    %500 = vmatprep.subr.mxu0 0.0
    %501 = vmatpush2.msra.mxu0 0.0
    %502 = vmatprep.subr.mxu0 0.0
    %503 = vmatpush2.msra.mxu0 0.0
    %504 = vmatprep.subr.mxu0 0.0
    %505 = vmatpush2.msra.mxu0 0.0
    %506 = vmatprep.subr.mxu0 0.0
    %507 = vmatpush2.msra.mxu0 0.0
    %508 = vmatprep.subr.mxu0 0.0
    %509 = vmatpush2.msra.mxu0 0.0
    %510 = vmatprep.subr.mxu0 0.0
    %511 = vmatpush2.msra.mxu0 0.0
    %512 = vmatprep.subr.mxu0 0.0
    %513 = vmatpush2.msra.mxu0 0.0
    %514 = vmatprep.subr.mxu0 0.0
    %515 = vmatpush2.msra.mxu0 0.0
    %516 = vmatprep.subr.mxu0 0.0
    %517 = vmatpush2.msra.mxu0 0.0
    %518 = vmatprep.mubr.f32.mxu0 0.0
    %519 = vmatmul.mubr.f32.gmra.mxu0 %v443
    %v520 = vpop.f32.mrf.mxu0
    %v521 = vadd.f32 %v432, %v520
    %v522 = vpop.f32.mrf.mxu0
    %v523 = vadd.f32 %v434, %v522
    %524 = vmatprep.mubr.f32.mxu0 0.0
    %525 = vmatmul.mubr.f32.gmra.mxu0 %v446
    %v526 = vpop.f32.mrf.mxu0
    %v527 = vadd.f32 %v438, %v526
    %v528 = vpop.f32.mrf.mxu0
    %v529 = vadd.f32 %v440, %v528
    %530 = vdwg.mxu0
    %v531 = vsel %vm80, 1, 0
    %v532 = vsel %vm81, 1, 0
    %vm533 = vcmp.eq.s32.totalorder %v531, 1
    %vm534 = vcmp.eq.s32.totalorder %v532, 1
    %535 = vrot.lane.b32.xlu0 %v289, 15
    %v536 = vpop.permute.xlu0 %535
    %537 = vrot.lane.b32.xlu0 %v290, 15
    %v538 = vpop.permute.xlu0 %537
    %539 = vrot.lane.b32.xlu0 %v291, 15
    %v540 = vpop.permute.xlu0 %539
    %541 = vrot.lane.b32.xlu0 %v292, 15
    %v542 = vpop.permute.xlu0 %541
    %543 = vrot.lane.b32.xlu0 %v293, 15
    %v544 = vpop.permute.xlu0 %543
    %545 = vrot.lane.b32.xlu0 %v294, 15
    %v546 = vpop.permute.xlu0 %545
    %vm547 = vcmask 121856
    %v548 = vsel %vm547, %v536, %v538
    %v549 = vsel %vm547, %v538, %v540
    %v550 = vsel %vm547, %v542, %v544
    %v551 = vsel %vm547, %v544, %v546
    %v556 = vsel %vm533, %v548, 0.0
    %v557 = vsel %vm534, %v549, 0.0
    %v558 = vsel %vm533, %v550, 0.0
    %v559 = vsel %vm534, %v551, 0.0
    %s560 = scalar_lea.vmem [#allocation3], 32
    %v561 = vld [vmem:[%s560] sm:$0xff]
    %v562 = vld [vmem:[%s560 + $0x8] sm:$0xf]
    %v564 = vsel %vm354, %v561, 0
    %v567 = vsel %vm354, %v562, 0
    %v570 = vsel %vm94, %v558, 0
    %v573 = vsel %vm94, %v559, 0
    %575 = vmatprep.subr.mxu0 0.0
    %576 = vmatpush1.msra.mxu0 0.0
    %577 = vmatprep.subr.mxu0 0.0
    %578 = vmatpush1.msra.mxu0 0.0
    %579 = vmatprep.subr.mxu0 0.0
    %580 = vmatpush1.msra.mxu0 0.0
    %581 = vmatprep.subr.mxu0 0.0
    %582 = vmatpush1.msra.mxu0 0.0
    %583 = vmatprep.subr.mxu0 0.0
    %584 = vmatpush1.msra.mxu0 0.0
    %585 = vmatprep.subr.mxu0 0.0
    %586 = vmatpush1.msra.mxu0 0.0
    %587 = vmatprep.subr.mxu0 0.0
    %588 = vmatpush1.msra.mxu0 0.0
    %589 = vmatprep.subr.mxu0 0.0
    %590 = vmatpush1.msra.mxu0 0.0
    %591 = vmatprep.subr.mxu0 0.0
    %592 = vmatpush1.msra.mxu0 0.0
    %593 = vmatprep.subr.mxu0 0.0
    %594 = vmatpush1.msra.mxu0 0.0
    %595 = vmatprep.subr.mxu0 0.0
    %596 = vmatpush1.msra.mxu0 0.0
    %597 = vmatprep.subr.mxu0 0.0
    %598 = vmatpush1.msra.mxu0 0.0
    %599 = vmatprep.subr.mxu0 0.0
    %600 = vmatpush1.msra.mxu0 0.0
    %601 = vmatprep.subr.mxu0 0.0
    %602 = vmatpush1.msra.mxu0 0.0
    %603 = vmatprep.subr.mxu0 %v573
    %604 = vmatpush1.msra.mxu0 %v570
    %605 = vmatprep.subr.mxu0 %v557
    %606 = vmatpush1.msra.mxu0 %v556
    %607 = vmatprep.subr.mxu0 0.0
    %608 = vmatpush2.msra.mxu0 0.0
    %609 = vmatprep.subr.mxu0 0.0
    %610 = vmatpush2.msra.mxu0 0.0
    %611 = vmatprep.subr.mxu0 0.0
    %612 = vmatpush2.msra.mxu0 0.0
    %613 = vmatprep.subr.mxu0 0.0
    %614 = vmatpush2.msra.mxu0 0.0
    %615 = vmatprep.subr.mxu0 0.0
    %616 = vmatpush2.msra.mxu0 0.0
    %617 = vmatprep.subr.mxu0 0.0
    %618 = vmatpush2.msra.mxu0 0.0
    %619 = vmatprep.subr.mxu0 0.0
    %620 = vmatpush2.msra.mxu0 0.0
    %621 = vmatprep.subr.mxu0 0.0
    %622 = vmatpush2.msra.mxu0 0.0
    %623 = vmatprep.subr.mxu0 0.0
    %624 = vmatpush2.msra.mxu0 0.0
    %625 = vmatprep.subr.mxu0 0.0
    %626 = vmatpush2.msra.mxu0 0.0
    %627 = vmatprep.subr.mxu0 0.0
    %628 = vmatpush2.msra.mxu0 0.0
    %629 = vmatprep.subr.mxu0 0.0
    %630 = vmatpush2.msra.mxu0 0.0
    %631 = vmatprep.subr.mxu0 0.0
    %632 = vmatpush2.msra.mxu0 0.0
    %633 = vmatprep.subr.mxu0 0.0
    %634 = vmatpush2.msra.mxu0 0.0
    %635 = vmatprep.subr.mxu0 0.0
    %636 = vmatpush2.msra.mxu0 0.0
    %637 = vmatprep.subr.mxu0 0.0
    %638 = vmatpush2.msra.mxu0 0.0
    %639 = vmatprep.mubr.f32.mxu0 0.0
    %640 = vmatmul.mubr.f32.gmra.mxu0 %v564
    %v641 = vpop.f32.mrf.mxu0
    %v642 = vadd.f32 0.0, %v641
    %v643 = vpop.f32.mrf.mxu0
    %v644 = vadd.f32 0.0, %v643
    %645 = vmatprep.mubr.f32.mxu0 0.0
    %646 = vmatmul.mubr.f32.gmra.mxu0 %v567
    %v647 = vpop.f32.mrf.mxu0
    %v648 = vadd.f32 0.0, %v647
    %v649 = vpop.f32.mrf.mxu0
    %v650 = vadd.f32 0.0, %v649
    %651 = vdwg.mxu0
    %v652 = vadd.f32 %v521, %v642
    %v653 = vadd.f32 %v523, %v644
    %v654 = vadd.f32 %v527, %v648
    %v655 = vadd.f32 %v529, %v650
    %656 = vrot.lane.b32.xlu0 %v289, 1
    %v657 = vpop.permute.xlu0 %656
    %658 = vrot.lane.b32.xlu0 %v290, 1
    %v659 = vpop.permute.xlu0 %658
    %660 = vrot.lane.b32.xlu0 %v291, 1
    %v661 = vpop.permute.xlu0 %660
    %662 = vrot.lane.b32.xlu0 %v292, 1
    %v663 = vpop.permute.xlu0 %662
    %664 = vrot.lane.b32.xlu0 %v293, 1
    %v665 = vpop.permute.xlu0 %664
    %666 = vrot.lane.b32.xlu0 %v294, 1
    %v667 = vpop.permute.xlu0 %666
    %vm668 = vcmask 7168
    %v669 = vsel %vm668, %v657, %v659
    %v670 = vsel %vm668, %v659, %v661
    %v671 = vsel %vm668, %v663, %v665
    %v672 = vsel %vm668, %v665, %v667
    %v677 = vsel %vm297, %v669, 0.0
    %v678 = vsel %vm298, %v670, 0.0
    %v679 = vsel %vm297, %v671, 0.0
    %v680 = vsel %vm298, %v672, 0.0
    %s681 = scalar_lea.vmem [#allocation3], 48
    %v682 = vld [vmem:[%s681] sm:$0xff]
    %v683 = vld [vmem:[%s681 + $0x8] sm:$0xf]
    %v685 = vsel %vm354, %v682, 0
    %v688 = vsel %vm354, %v683, 0
    %v691 = vsel %vm94, %v679, 0
    %v694 = vsel %vm94, %v680, 0
    %696 = vmatprep.subr.mxu0 0.0
    %697 = vmatpush1.msra.mxu0 0.0
    %698 = vmatprep.subr.mxu0 0.0
    %699 = vmatpush1.msra.mxu0 0.0
    %700 = vmatprep.subr.mxu0 0.0
    %701 = vmatpush1.msra.mxu0 0.0
    %702 = vmatprep.subr.mxu0 0.0
    %703 = vmatpush1.msra.mxu0 0.0
    %704 = vmatprep.subr.mxu0 0.0
    %705 = vmatpush1.msra.mxu0 0.0
    %706 = vmatprep.subr.mxu0 0.0
    %707 = vmatpush1.msra.mxu0 0.0
    %708 = vmatprep.subr.mxu0 0.0
    %709 = vmatpush1.msra.mxu0 0.0
    %710 = vmatprep.subr.mxu0 0.0
    %711 = vmatpush1.msra.mxu0 0.0
    %712 = vmatprep.subr.mxu0 0.0
    %713 = vmatpush1.msra.mxu0 0.0
    %714 = vmatprep.subr.mxu0 0.0
    %715 = vmatpush1.msra.mxu0 0.0
    %716 = vmatprep.subr.mxu0 0.0
    %717 = vmatpush1.msra.mxu0 0.0
    %718 = vmatprep.subr.mxu0 0.0
    %719 = vmatpush1.msra.mxu0 0.0
    %720 = vmatprep.subr.mxu0 0.0
    %721 = vmatpush1.msra.mxu0 0.0
    %722 = vmatprep.subr.mxu0 0.0
    %723 = vmatpush1.msra.mxu0 0.0
    %724 = vmatprep.subr.mxu0 %v694
    %725 = vmatpush1.msra.mxu0 %v691
    %726 = vmatprep.subr.mxu0 %v678
    %727 = vmatpush1.msra.mxu0 %v677
    %728 = vmatprep.subr.mxu0 0.0
    %729 = vmatpush2.msra.mxu0 0.0
    %730 = vmatprep.subr.mxu0 0.0
    %731 = vmatpush2.msra.mxu0 0.0
    %732 = vmatprep.subr.mxu0 0.0
    %733 = vmatpush2.msra.mxu0 0.0
    %734 = vmatprep.subr.mxu0 0.0
    %735 = vmatpush2.msra.mxu0 0.0
    %736 = vmatprep.subr.mxu0 0.0
    %737 = vmatpush2.msra.mxu0 0.0
    %738 = vmatprep.subr.mxu0 0.0
    %739 = vmatpush2.msra.mxu0 0.0
    %740 = vmatprep.subr.mxu0 0.0
    %741 = vmatpush2.msra.mxu0 0.0
    %742 = vmatprep.subr.mxu0 0.0
    %743 = vmatpush2.msra.mxu0 0.0
    %744 = vmatprep.subr.mxu0 0.0
    %745 = vmatpush2.msra.mxu0 0.0
    %746 = vmatprep.subr.mxu0 0.0
    %747 = vmatpush2.msra.mxu0 0.0
    %748 = vmatprep.subr.mxu0 0.0
    %749 = vmatpush2.msra.mxu0 0.0
    %750 = vmatprep.subr.mxu0 0.0
    %751 = vmatpush2.msra.mxu0 0.0
    %752 = vmatprep.subr.mxu0 0.0
    %753 = vmatpush2.msra.mxu0 0.0
    %754 = vmatprep.subr.mxu0 0.0
    %755 = vmatpush2.msra.mxu0 0.0
    %756 = vmatprep.subr.mxu0 0.0
    %757 = vmatpush2.msra.mxu0 0.0
    %758 = vmatprep.subr.mxu0 0.0
    %759 = vmatpush2.msra.mxu0 0.0
    %760 = vmatprep.mubr.f32.mxu0 0.0
    %761 = vmatmul.mubr.f32.gmra.mxu0 %v685
    %v762 = vpop.f32.mrf.mxu0
    %v763 = vadd.f32 0.0, %v762
    %v764 = vpop.f32.mrf.mxu0
    %v765 = vadd.f32 0.0, %v764
    %766 = vmatprep.mubr.f32.mxu0 0.0
    %767 = vmatmul.mubr.f32.gmra.mxu0 %v688
    %v768 = vpop.f32.mrf.mxu0
    %v769 = vadd.f32 0.0, %v768
    %v770 = vpop.f32.mrf.mxu0
    %v771 = vadd.f32 0.0, %v770
    %772 = vdwg.mxu0
    %v773 = vadd.f32 %v652, %v763
    %v774 = vadd.f32 %v653, %v765
    %v775 = vadd.f32 %v654, %v769
    %v776 = vadd.f32 %v655, %v771
    %s777 = scalar_lea.vmem [#allocation3], 64
    %v778 = vld [vmem:[%s777] sm:$0xff]
    %v779 = vld [vmem:[%s777 + $0x8] sm:$0xf]
    %v781 = vsel %vm354, %v778, 0
    %v784 = vsel %vm354, %v779, 0
    %v787 = vsel %vm94, %v281, 0
    %v790 = vsel %vm94, %v283, 0
    %792 = vmatprep.subr.mxu0 0.0
    %793 = vmatpush1.msra.mxu0 0.0
    %794 = vmatprep.subr.mxu0 0.0
    %795 = vmatpush1.msra.mxu0 0.0
    %796 = vmatprep.subr.mxu0 0.0
    %797 = vmatpush1.msra.mxu0 0.0
    %798 = vmatprep.subr.mxu0 0.0
    %799 = vmatpush1.msra.mxu0 0.0
    %800 = vmatprep.subr.mxu0 0.0
    %801 = vmatpush1.msra.mxu0 0.0
    %802 = vmatprep.subr.mxu0 0.0
    %803 = vmatpush1.msra.mxu0 0.0
    %804 = vmatprep.subr.mxu0 0.0
    %805 = vmatpush1.msra.mxu0 0.0
    %806 = vmatprep.subr.mxu0 0.0
    %807 = vmatpush1.msra.mxu0 0.0
    %808 = vmatprep.subr.mxu0 0.0
    %809 = vmatpush1.msra.mxu0 0.0
    %810 = vmatprep.subr.mxu0 0.0
    %811 = vmatpush1.msra.mxu0 0.0
    %812 = vmatprep.subr.mxu0 0.0
    %813 = vmatpush1.msra.mxu0 0.0
    %814 = vmatprep.subr.mxu0 0.0
    %815 = vmatpush1.msra.mxu0 0.0
    %816 = vmatprep.subr.mxu0 0.0
    %817 = vmatpush1.msra.mxu0 0.0
    %818 = vmatprep.subr.mxu0 0.0
    %819 = vmatpush1.msra.mxu0 0.0
    %820 = vmatprep.subr.mxu0 %v790
    %821 = vmatpush1.msra.mxu0 %v787
    %822 = vmatprep.subr.mxu0 %v277
    %823 = vmatpush1.msra.mxu0 %v275
    %824 = vmatprep.subr.mxu0 0.0
    %825 = vmatpush2.msra.mxu0 0.0
    %826 = vmatprep.subr.mxu0 0.0
    %827 = vmatpush2.msra.mxu0 0.0
    %828 = vmatprep.subr.mxu0 0.0
    %829 = vmatpush2.msra.mxu0 0.0
    %830 = vmatprep.subr.mxu0 0.0
    %831 = vmatpush2.msra.mxu0 0.0
    %832 = vmatprep.subr.mxu0 0.0
    %833 = vmatpush2.msra.mxu0 0.0
    %834 = vmatprep.subr.mxu0 0.0
    %835 = vmatpush2.msra.mxu0 0.0
    %836 = vmatprep.subr.mxu0 0.0
    %837 = vmatpush2.msra.mxu0 0.0
    %838 = vmatprep.subr.mxu0 0.0
    %839 = vmatpush2.msra.mxu0 0.0
    %840 = vmatprep.subr.mxu0 0.0
    %841 = vmatpush2.msra.mxu0 0.0
    %842 = vmatprep.subr.mxu0 0.0
    %843 = vmatpush2.msra.mxu0 0.0
    %844 = vmatprep.subr.mxu0 0.0
    %845 = vmatpush2.msra.mxu0 0.0
    %846 = vmatprep.subr.mxu0 0.0
    %847 = vmatpush2.msra.mxu0 0.0
    %848 = vmatprep.subr.mxu0 0.0
    %849 = vmatpush2.msra.mxu0 0.0
    %850 = vmatprep.subr.mxu0 0.0
    %851 = vmatpush2.msra.mxu0 0.0
    %852 = vmatprep.subr.mxu0 0.0
    %853 = vmatpush2.msra.mxu0 0.0
    %854 = vmatprep.subr.mxu0 0.0
    %855 = vmatpush2.msra.mxu0 0.0
    %856 = vmatprep.mubr.f32.mxu0 0.0
    %857 = vmatmul.mubr.f32.gmra.mxu0 %v781
    %v858 = vpop.f32.mrf.mxu0
    %v859 = vadd.f32 0.0, %v858
    %v860 = vpop.f32.mrf.mxu0
    %v861 = vadd.f32 0.0, %v860
    %862 = vmatprep.mubr.f32.mxu0 0.0
    %863 = vmatmul.mubr.f32.gmra.mxu0 %v784
    %v864 = vpop.f32.mrf.mxu0
    %v865 = vadd.f32 0.0, %v864
    %v866 = vpop.f32.mrf.mxu0
    %v867 = vadd.f32 0.0, %v866
    %868 = vdwg.mxu0
    %v869 = vadd.f32 %v773, %v859
    %v870 = vadd.f32 %v774, %v861
    %v871 = vadd.f32 %v775, %v865
    %v872 = vadd.f32 %v776, %v867
    %v873 = vld [vmem:[#allocation2 + $0x8] sm:$0xff]
    %v874 = vld [vmem:[#allocation2 + $0x10] sm:$0xff]
    %v875 = vld [vmem:[#allocation2 + $0x18] sm:$0xff]
    %v876 = vld [vmem:[#allocation2 + $0x28] sm:$0xf]
    %v877 = vld [vmem:[#allocation2 + $0x30] sm:$0xf]
    %v878 = vld [vmem:[#allocation2 + $0x38] sm:$0xf]
    %885 = vrot.lane.b32.xlu0 %v873, 127
    %v886 = vpop.permute.xlu0 %885
    %887 = vrot.lane.b32.xlu0 %v874, 127
    %v888 = vpop.permute.xlu0 %887
    %889 = vrot.lane.b32.xlu0 %v875, 127
    %v890 = vpop.permute.xlu0 %889
    %891 = vrot.lane.b32.xlu0 %v876, 127
    %v892 = vpop.permute.xlu0 %891
    %893 = vrot.lane.b32.xlu0 %v877, 127
    %v894 = vpop.permute.xlu0 %893
    %895 = vrot.lane.b32.xlu0 %v878, 127
    %v896 = vpop.permute.xlu0 %895
    %vm897 = vcmask 1039360
    %v898 = vsel %vm897, %v886, %v888
    %v899 = vsel %vm897, %v888, %v890
    %v900 = vsel %vm897, %v892, %v894
    %v901 = vsel %vm897, %v894, %v896
    %v906 = vsel %vm533, %v898, 0.0
    %v907 = vsel %vm534, %v899, 0.0
    %v908 = vsel %vm533, %v900, 0.0
    %v909 = vsel %vm534, %v901, 0.0
    %s910 = scalar_lea.vmem [#allocation3], 80
    %v911 = vld [vmem:[%s910] sm:$0xff]
    %v912 = vld [vmem:[%s910 + $0x8] sm:$0xf]
    %v914 = vsel %vm354, %v911, 0
    %v917 = vsel %vm354, %v912, 0
    %v920 = vsel %vm94, %v908, 0
    %v923 = vsel %vm94, %v909, 0
    %925 = vmatprep.subr.mxu0 0.0
    %926 = vmatpush1.msra.mxu0 0.0
    %927 = vmatprep.subr.mxu0 0.0
    %928 = vmatpush1.msra.mxu0 0.0
    %929 = vmatprep.subr.mxu0 0.0
    %930 = vmatpush1.msra.mxu0 0.0
    %931 = vmatprep.subr.mxu0 0.0
    %932 = vmatpush1.msra.mxu0 0.0
    %933 = vmatprep.subr.mxu0 0.0
    %934 = vmatpush1.msra.mxu0 0.0
    %935 = vmatprep.subr.mxu0 0.0
    %936 = vmatpush1.msra.mxu0 0.0
    %937 = vmatprep.subr.mxu0 0.0
    %938 = vmatpush1.msra.mxu0 0.0
    %939 = vmatprep.subr.mxu0 0.0
    %940 = vmatpush1.msra.mxu0 0.0
    %941 = vmatprep.subr.mxu0 0.0
    %942 = vmatpush1.msra.mxu0 0.0
    %943 = vmatprep.subr.mxu0 0.0
    %944 = vmatpush1.msra.mxu0 0.0
    %945 = vmatprep.subr.mxu0 0.0
    %946 = vmatpush1.msra.mxu0 0.0
    %947 = vmatprep.subr.mxu0 0.0
    %948 = vmatpush1.msra.mxu0 0.0
    %949 = vmatprep.subr.mxu0 0.0
    %950 = vmatpush1.msra.mxu0 0.0
    %951 = vmatprep.subr.mxu0 0.0
    %952 = vmatpush1.msra.mxu0 0.0
    %953 = vmatprep.subr.mxu0 %v923
    %954 = vmatpush1.msra.mxu0 %v920
    %955 = vmatprep.subr.mxu0 %v907
    %956 = vmatpush1.msra.mxu0 %v906
    %957 = vmatprep.subr.mxu0 0.0
    %958 = vmatpush2.msra.mxu0 0.0
    %959 = vmatprep.subr.mxu0 0.0
    %960 = vmatpush2.msra.mxu0 0.0
    %961 = vmatprep.subr.mxu0 0.0
    %962 = vmatpush2.msra.mxu0 0.0
    %963 = vmatprep.subr.mxu0 0.0
    %964 = vmatpush2.msra.mxu0 0.0
    %965 = vmatprep.subr.mxu0 0.0
    %966 = vmatpush2.msra.mxu0 0.0
    %967 = vmatprep.subr.mxu0 0.0
    %968 = vmatpush2.msra.mxu0 0.0
    %969 = vmatprep.subr.mxu0 0.0
    %970 = vmatpush2.msra.mxu0 0.0
    %971 = vmatprep.subr.mxu0 0.0
    %972 = vmatpush2.msra.mxu0 0.0
    %973 = vmatprep.subr.mxu0 0.0
    %974 = vmatpush2.msra.mxu0 0.0
    %975 = vmatprep.subr.mxu0 0.0
    %976 = vmatpush2.msra.mxu0 0.0
    %977 = vmatprep.subr.mxu0 0.0
    %978 = vmatpush2.msra.mxu0 0.0
    %979 = vmatprep.subr.mxu0 0.0
    %980 = vmatpush2.msra.mxu0 0.0
    %981 = vmatprep.subr.mxu0 0.0
    %982 = vmatpush2.msra.mxu0 0.0
    %983 = vmatprep.subr.mxu0 0.0
    %984 = vmatpush2.msra.mxu0 0.0
    %985 = vmatprep.subr.mxu0 0.0
    %986 = vmatpush2.msra.mxu0 0.0
    %987 = vmatprep.subr.mxu0 0.0
    %988 = vmatpush2.msra.mxu0 0.0
    %989 = vmatprep.mubr.f32.mxu0 0.0
    %990 = vmatmul.mubr.f32.gmra.mxu0 %v914
    %v991 = vpop.f32.mrf.mxu0
    %v992 = vadd.f32 0.0, %v991
    %v993 = vpop.f32.mrf.mxu0
    %v994 = vadd.f32 0.0, %v993
    %995 = vmatprep.mubr.f32.mxu0 0.0
    %996 = vmatmul.mubr.f32.gmra.mxu0 %v917
    %v997 = vpop.f32.mrf.mxu0
    %v998 = vadd.f32 0.0, %v997
    %v999 = vpop.f32.mrf.mxu0
    %v1000 = vadd.f32 0.0, %v999
    %1001 = vdwg.mxu0
    %v1002 = vadd.f32 %v869, %v992
    %v1003 = vadd.f32 %v870, %v994
    %v1004 = vadd.f32 %v871, %v998
    %v1005 = vadd.f32 %v872, %v1000
    %1006 = vrot.lane.b32.xlu0 %v873, 113
    %v1007 = vpop.permute.xlu0 %1006
    %1008 = vrot.lane.b32.xlu0 %v874, 113
    %v1009 = vpop.permute.xlu0 %1008
    %1010 = vrot.lane.b32.xlu0 %v875, 113
    %v1011 = vpop.permute.xlu0 %1010
    %1012 = vrot.lane.b32.xlu0 %v876, 113
    %v1013 = vpop.permute.xlu0 %1012
    %1014 = vrot.lane.b32.xlu0 %v877, 113
    %v1015 = vpop.permute.xlu0 %1014
    %1016 = vrot.lane.b32.xlu0 %v878, 113
    %v1017 = vpop.permute.xlu0 %1016
    %vm1018 = vcmask 924672
    %v1019 = vsel %vm1018, %v1007, %v1009
    %v1020 = vsel %vm1018, %v1009, %v1011
    %v1021 = vsel %vm1018, %v1013, %v1015
    %v1022 = vsel %vm1018, %v1015, %v1017
    %v1027 = vsel %vm297, %v1019, 0.0
    %v1028 = vsel %vm298, %v1020, 0.0
    %v1029 = vsel %vm297, %v1021, 0.0
    %v1030 = vsel %vm298, %v1022, 0.0
    %s1031 = scalar_lea.vmem [#allocation3], 96
    %v1032 = vld [vmem:[%s1031] sm:$0xff]
    %v1033 = vld [vmem:[%s1031 + $0x8] sm:$0xf]
    %v1035 = vsel %vm354, %v1032, 0
    %v1038 = vsel %vm354, %v1033, 0
    %v1041 = vsel %vm94, %v1029, 0
    %v1044 = vsel %vm94, %v1030, 0
    %1046 = vmatprep.subr.mxu0 0.0
    %1047 = vmatpush1.msra.mxu0 0.0
    %1048 = vmatprep.subr.mxu0 0.0
    %1049 = vmatpush1.msra.mxu0 0.0
    %1050 = vmatprep.subr.mxu0 0.0
    %1051 = vmatpush1.msra.mxu0 0.0
    %1052 = vmatprep.subr.mxu0 0.0
    %1053 = vmatpush1.msra.mxu0 0.0
    %1054 = vmatprep.subr.mxu0 0.0
    %1055 = vmatpush1.msra.mxu0 0.0
    %1056 = vmatprep.subr.mxu0 0.0
    %1057 = vmatpush1.msra.mxu0 0.0
    %1058 = vmatprep.subr.mxu0 0.0
    %1059 = vmatpush1.msra.mxu0 0.0
    %1060 = vmatprep.subr.mxu0 0.0
    %1061 = vmatpush1.msra.mxu0 0.0
    %1062 = vmatprep.subr.mxu0 0.0
    %1063 = vmatpush1.msra.mxu0 0.0
    %1064 = vmatprep.subr.mxu0 0.0
    %1065 = vmatpush1.msra.mxu0 0.0
    %1066 = vmatprep.subr.mxu0 0.0
    %1067 = vmatpush1.msra.mxu0 0.0
    %1068 = vmatprep.subr.mxu0 0.0
    %1069 = vmatpush1.msra.mxu0 0.0
    %1070 = vmatprep.subr.mxu0 0.0
    %1071 = vmatpush1.msra.mxu0 0.0
    %1072 = vmatprep.subr.mxu0 0.0
    %1073 = vmatpush1.msra.mxu0 0.0
    %1074 = vmatprep.subr.mxu0 %v1044
    %1075 = vmatpush1.msra.mxu0 %v1041
    %1076 = vmatprep.subr.mxu0 %v1028
    %1077 = vmatpush1.msra.mxu0 %v1027
    %1078 = vmatprep.subr.mxu0 0.0
    %1079 = vmatpush2.msra.mxu0 0.0
    %1080 = vmatprep.subr.mxu0 0.0
    %1081 = vmatpush2.msra.mxu0 0.0
    %1082 = vmatprep.subr.mxu0 0.0
    %1083 = vmatpush2.msra.mxu0 0.0
    %1084 = vmatprep.subr.mxu0 0.0
    %1085 = vmatpush2.msra.mxu0 0.0
    %1086 = vmatprep.subr.mxu0 0.0
    %1087 = vmatpush2.msra.mxu0 0.0
    %1088 = vmatprep.subr.mxu0 0.0
    %1089 = vmatpush2.msra.mxu0 0.0
    %1090 = vmatprep.subr.mxu0 0.0
    %1091 = vmatpush2.msra.mxu0 0.0
    %1092 = vmatprep.subr.mxu0 0.0
    %1093 = vmatpush2.msra.mxu0 0.0
    %1094 = vmatprep.subr.mxu0 0.0
    %1095 = vmatpush2.msra.mxu0 0.0
    %1096 = vmatprep.subr.mxu0 0.0
    %1097 = vmatpush2.msra.mxu0 0.0
    %1098 = vmatprep.subr.mxu0 0.0
    %1099 = vmatpush2.msra.mxu0 0.0
    %1100 = vmatprep.subr.mxu0 0.0
    %1101 = vmatpush2.msra.mxu0 0.0
    %1102 = vmatprep.subr.mxu0 0.0
    %1103 = vmatpush2.msra.mxu0 0.0
    %1104 = vmatprep.subr.mxu0 0.0
    %1105 = vmatpush2.msra.mxu0 0.0
    %1106 = vmatprep.subr.mxu0 0.0
    %1107 = vmatpush2.msra.mxu0 0.0
    %1108 = vmatprep.subr.mxu0 0.0
    %1109 = vmatpush2.msra.mxu0 0.0
    %1110 = vmatprep.mubr.f32.mxu0 0.0
    %1111 = vmatmul.mubr.f32.gmra.mxu0 %v1035
    %v1112 = vpop.f32.mrf.mxu0
    %v1113 = vadd.f32 0.0, %v1112
    %v1114 = vpop.f32.mrf.mxu0
    %v1115 = vadd.f32 0.0, %v1114
    %1116 = vmatprep.mubr.f32.mxu0 0.0
    %1117 = vmatmul.mubr.f32.gmra.mxu0 %v1038
    %v1118 = vpop.f32.mrf.mxu0
    %v1119 = vadd.f32 0.0, %v1118
    %v1120 = vpop.f32.mrf.mxu0
    %v1121 = vadd.f32 0.0, %v1120
    %1122 = vdwg.mxu0
    %v1123 = vadd.f32 %v1002, %v1113
    %v1124 = vadd.f32 %v1003, %v1115
    %v1125 = vadd.f32 %v1004, %v1119
    %v1126 = vadd.f32 %v1005, %v1121
    %s1127 = scalar_lea.vmem [#allocation3], 112
    %v1128 = vld [vmem:[%s1127] sm:$0xff]
    %v1129 = vld [vmem:[%s1127 + $0x8] sm:$0xf]
    %1130 = vrot.lane.b32.xlu0 %v873, 112
    %v1131 = vpop.permute.xlu0 %1130
    %1132 = vrot.lane.b32.xlu0 %v874, 112
    %v1133 = vpop.permute.xlu0 %1132
    %1134 = vrot.lane.b32.xlu0 %v875, 112
    %v1135 = vpop.permute.xlu0 %1134
    %1136 = vrot.lane.b32.xlu0 %v876, 112
    %v1137 = vpop.permute.xlu0 %1136
    %1138 = vrot.lane.b32.xlu0 %v877, 112
    %v1139 = vpop.permute.xlu0 %1138
    %1140 = vrot.lane.b32.xlu0 %v878, 112
    %v1141 = vpop.permute.xlu0 %1140
    %vm1142 = vcmask 916480
    %v1143 = vsel %vm1142, %v1131, %v1133
    %v1144 = vsel %vm1142, %v1133, %v1135
    %v1145 = vsel %vm1142, %v1137, %v1139
    %v1146 = vsel %vm1142, %v1139, %v1141
    %v1150 = vsel %vm354, %v1128, 0
    %v1153 = vsel %vm354, %v1129, 0
    %v1155 = vsel %vm94, %v1145, 0
    %v1157 = vsel %vm94, %v1146, 0
    %1159 = vmatprep.subr.mxu0 0.0
    %1160 = vmatpush1.msra.mxu0 0.0
    %1161 = vmatprep.subr.mxu0 0.0
    %1162 = vmatpush1.msra.mxu0 0.0
    %1163 = vmatprep.subr.mxu0 0.0
    %1164 = vmatpush1.msra.mxu0 0.0
    %1165 = vmatprep.subr.mxu0 0.0
    %1166 = vmatpush1.msra.mxu0 0.0
    %1167 = vmatprep.subr.mxu0 0.0
    %1168 = vmatpush1.msra.mxu0 0.0
    %1169 = vmatprep.subr.mxu0 0.0
    %1170 = vmatpush1.msra.mxu0 0.0
    %1171 = vmatprep.subr.mxu0 0.0
    %1172 = vmatpush1.msra.mxu0 0.0
    %1173 = vmatprep.subr.mxu0 0.0
    %1174 = vmatpush1.msra.mxu0 0.0
    %1175 = vmatprep.subr.mxu0 0.0
    %1176 = vmatpush1.msra.mxu0 0.0
    %1177 = vmatprep.subr.mxu0 0.0
    %1178 = vmatpush1.msra.mxu0 0.0
    %1179 = vmatprep.subr.mxu0 0.0
    %1180 = vmatpush1.msra.mxu0 0.0
    %1181 = vmatprep.subr.mxu0 0.0
    %1182 = vmatpush1.msra.mxu0 0.0
    %1183 = vmatprep.subr.mxu0 0.0
    %1184 = vmatpush1.msra.mxu0 0.0
    %1185 = vmatprep.subr.mxu0 0.0
    %1186 = vmatpush1.msra.mxu0 0.0
    %1187 = vmatprep.subr.mxu0 %v1157
    %1188 = vmatpush1.msra.mxu0 %v1155
    %1189 = vmatprep.subr.mxu0 %v1144
    %1190 = vmatpush1.msra.mxu0 %v1143
    %1191 = vmatprep.subr.mxu0 0.0
    %1192 = vmatpush2.msra.mxu0 0.0
    %1193 = vmatprep.subr.mxu0 0.0
    %1194 = vmatpush2.msra.mxu0 0.0
    %1195 = vmatprep.subr.mxu0 0.0
    %1196 = vmatpush2.msra.mxu0 0.0
    %1197 = vmatprep.subr.mxu0 0.0
    %1198 = vmatpush2.msra.mxu0 0.0
    %1199 = vmatprep.subr.mxu0 0.0
    %1200 = vmatpush2.msra.mxu0 0.0
    %1201 = vmatprep.subr.mxu0 0.0
    %1202 = vmatpush2.msra.mxu0 0.0
    %1203 = vmatprep.subr.mxu0 0.0
    %1204 = vmatpush2.msra.mxu0 0.0
    %1205 = vmatprep.subr.mxu0 0.0
    %1206 = vmatpush2.msra.mxu0 0.0
    %1207 = vmatprep.subr.mxu0 0.0
    %1208 = vmatpush2.msra.mxu0 0.0
    %1209 = vmatprep.subr.mxu0 0.0
    %1210 = vmatpush2.msra.mxu0 0.0
    %1211 = vmatprep.subr.mxu0 0.0
    %1212 = vmatpush2.msra.mxu0 0.0
    %1213 = vmatprep.subr.mxu0 0.0
    %1214 = vmatpush2.msra.mxu0 0.0
    %1215 = vmatprep.subr.mxu0 0.0
    %1216 = vmatpush2.msra.mxu0 0.0
    %1217 = vmatprep.subr.mxu0 0.0
    %1218 = vmatpush2.msra.mxu0 0.0
    %1219 = vmatprep.subr.mxu0 0.0
    %1220 = vmatpush2.msra.mxu0 0.0
    %1221 = vmatprep.subr.mxu0 0.0
    %1222 = vmatpush2.msra.mxu0 0.0
    %1223 = vmatprep.mubr.f32.mxu0 0.0
    %1224 = vmatmul.mubr.f32.gmra.mxu0 %v1150
    %v1225 = vpop.f32.mrf.mxu0
    %v1226 = vadd.f32 0.0, %v1225
    %v1227 = vpop.f32.mrf.mxu0
    %v1228 = vadd.f32 0.0, %v1227
    %1229 = vmatprep.mubr.f32.mxu0 0.0
    %1230 = vmatmul.mubr.f32.gmra.mxu0 %v1153
    %v1231 = vpop.f32.mrf.mxu0
    %v1232 = vadd.f32 0.0, %v1231
    %v1233 = vpop.f32.mrf.mxu0
    %v1234 = vadd.f32 0.0, %v1233
    %1235 = vdwg.mxu0
    %v1236 = vadd.f32 %v1123, %v1226
    %v1237 = vadd.f32 %v1124, %v1228
    %v1238 = vadd.f32 %v1125, %v1232
    %v1239 = vadd.f32 %v1126, %v1234
    %1240 = vrot.lane.b32.xlu0 %v873, 111
    %v1241 = vpop.permute.xlu0 %1240
    %1242 = vrot.lane.b32.xlu0 %v874, 111
    %v1243 = vpop.permute.xlu0 %1242
    %1244 = vrot.lane.b32.xlu0 %v875, 111
    %v1245 = vpop.permute.xlu0 %1244
    %1246 = vrot.lane.b32.xlu0 %v876, 111
    %v1247 = vpop.permute.xlu0 %1246
    %1248 = vrot.lane.b32.xlu0 %v877, 111
    %v1249 = vpop.permute.xlu0 %1248
    %1250 = vrot.lane.b32.xlu0 %v878, 111
    %v1251 = vpop.permute.xlu0 %1250
    %vm1252 = vcmask 908288
    %v1253 = vsel %vm1252, %v1241, %v1243
    %v1254 = vsel %vm1252, %v1243, %v1245
    %v1255 = vsel %vm1252, %v1247, %v1249
    %v1256 = vsel %vm1252, %v1249, %v1251
    %v1261 = vsel %vm533, %v1253, 0.0
    %v1262 = vsel %vm534, %v1254, 0.0
    %v1263 = vsel %vm533, %v1255, 0.0
    %v1264 = vsel %vm534, %v1256, 0.0
    %s1265 = scalar_lea.vmem [#allocation3], 128
    %v1266 = vld [vmem:[%s1265] sm:$0xff]
    %v1267 = vld [vmem:[%s1265 + $0x8] sm:$0xf]
    %v1269 = vsel %vm354, %v1266, 0
    %v1272 = vsel %vm354, %v1267, 0
    %v1275 = vsel %vm94, %v1263, 0
    %v1278 = vsel %vm94, %v1264, 0
    %1280 = vmatprep.subr.mxu0 0.0
    %1281 = vmatpush1.msra.mxu0 0.0
    %1282 = vmatprep.subr.mxu0 0.0
    %1283 = vmatpush1.msra.mxu0 0.0
    %1284 = vmatprep.subr.mxu0 0.0
    %1285 = vmatpush1.msra.mxu0 0.0
    %1286 = vmatprep.subr.mxu0 0.0
    %1287 = vmatpush1.msra.mxu0 0.0
    %1288 = vmatprep.subr.mxu0 0.0
    %1289 = vmatpush1.msra.mxu0 0.0
    %1290 = vmatprep.subr.mxu0 0.0
    %1291 = vmatpush1.msra.mxu0 0.0
    %1292 = vmatprep.subr.mxu0 0.0
    %1293 = vmatpush1.msra.mxu0 0.0
    %1294 = vmatprep.subr.mxu0 0.0
    %1295 = vmatpush1.msra.mxu0 0.0
    %1296 = vmatprep.subr.mxu0 0.0
    %1297 = vmatpush1.msra.mxu0 0.0
    %1298 = vmatprep.subr.mxu0 0.0
    %1299 = vmatpush1.msra.mxu0 0.0
    %1300 = vmatprep.subr.mxu0 0.0
    %1301 = vmatpush1.msra.mxu0 0.0
    %1302 = vmatprep.subr.mxu0 0.0
    %1303 = vmatpush1.msra.mxu0 0.0
    %1304 = vmatprep.subr.mxu0 0.0
    %1305 = vmatpush1.msra.mxu0 0.0
    %1306 = vmatprep.subr.mxu0 0.0
    %1307 = vmatpush1.msra.mxu0 0.0
    %1308 = vmatprep.subr.mxu0 %v1278
    %1309 = vmatpush1.msra.mxu0 %v1275
    %1310 = vmatprep.subr.mxu0 %v1262
    %1311 = vmatpush1.msra.mxu0 %v1261
    %1312 = vmatprep.subr.mxu0 0.0
    %1313 = vmatpush2.msra.mxu0 0.0
    %1314 = vmatprep.subr.mxu0 0.0
    %1315 = vmatpush2.msra.mxu0 0.0
    %1316 = vmatprep.subr.mxu0 0.0
    %1317 = vmatpush2.msra.mxu0 0.0
    %1318 = vmatprep.subr.mxu0 0.0
    %1319 = vmatpush2.msra.mxu0 0.0
    %1320 = vmatprep.subr.mxu0 0.0
    %1321 = vmatpush2.msra.mxu0 0.0
    %1322 = vmatprep.subr.mxu0 0.0
    %1323 = vmatpush2.msra.mxu0 0.0
    %1324 = vmatprep.subr.mxu0 0.0
    %1325 = vmatpush2.msra.mxu0 0.0
    %1326 = vmatprep.subr.mxu0 0.0
    %1327 = vmatpush2.msra.mxu0 0.0
    %1328 = vmatprep.subr.mxu0 0.0
    %1329 = vmatpush2.msra.mxu0 0.0
    %1330 = vmatprep.subr.mxu0 0.0
    %1331 = vmatpush2.msra.mxu0 0.0
    %1332 = vmatprep.subr.mxu0 0.0
    %1333 = vmatpush2.msra.mxu0 0.0
    %1334 = vmatprep.subr.mxu0 0.0
    %1335 = vmatpush2.msra.mxu0 0.0
    %1336 = vmatprep.subr.mxu0 0.0
    %1337 = vmatpush2.msra.mxu0 0.0
    %1338 = vmatprep.subr.mxu0 0.0
    %1339 = vmatpush2.msra.mxu0 0.0
    %1340 = vmatprep.subr.mxu0 0.0
    %1341 = vmatpush2.msra.mxu0 0.0
    %1342 = vmatprep.subr.mxu0 0.0
    %1343 = vmatpush2.msra.mxu0 0.0
    %1344 = vmatprep.mubr.f32.mxu0 0.0
    %1345 = vmatmul.mubr.f32.gmra.mxu0 %v1269
    %v1346 = vpop.f32.mrf.mxu0
    %v1347 = vadd.f32 0.0, %v1346
    %v1348 = vpop.f32.mrf.mxu0
    %v1349 = vadd.f32 0.0, %v1348
    %1350 = vmatprep.mubr.f32.mxu0 0.0
    %1351 = vmatmul.mubr.f32.gmra.mxu0 %v1272
    %v1352 = vpop.f32.mrf.mxu0
    %v1353 = vadd.f32 0.0, %v1352
    %v1354 = vpop.f32.mrf.mxu0
    %v1355 = vadd.f32 0.0, %v1354
    %1356 = vdwg.mxu0
    %v1357 = vadd.f32 %v1236, %v1347
    %v1358 = vadd.f32 %v1237, %v1349
    %v1359 = vadd.f32 %v1238, %v1353
    %v1360 = vadd.f32 %v1239, %v1355
    %1362 = vset.pattern.permute.xlu0 0
    %1363 = vperm.xlu0 %1362, %v49
    %v1364 = vpop.permute.xlu0 %1363
    %1367 = vset.pattern.permute.xlu0 0
    %1368 = vperm.xlu0 %1367, %v50
    %v1369 = vpop.permute.xlu0 %1368
    %v1371 = vadd.f32 %v1357, %v1364
    %v1372 = vadd.f32 %v1358, %v1364
    %v1373 = vadd.f32 %v1359, %v1369
    %v1374 = vadd.f32 %v1360, %v1369
    %1375 = vst [vmem:[%s8] sm:$0xff] %v1371
    %1376 = vst [vmem:[%s8 + $0x8] sm:$0xff] %v1372
    %1377 = vst [vmem:[%s8 + $0x10] sm:$0xf] %v1373
    %1378 = vst [vmem:[%s8 + $0x18] sm:$0xf] %v1374
    %s1379 = scalar_lea.vmem %s0, 8
    %v1380 = vld [vmem:[%s1379] sm:$0xff]
    %s1381 = scalar_lea.vmem %s1, 8
    %v1382 = vld [vmem:[%s1381] sm:$0xff]
    %v1384 = vcombine.high %v1380, %v1380
    %v1387 = vcombine.low %v1382, %v1382
    %v1389 = vsel %vm94, %v1380, %v1387
    %v1390 = vsel %vm94, %v1384, %v1382
    %1391 = vmatprep.subr.mxu0 0.0
    %1392 = vmatpush1.msra.mxu0 0.0
    %1393 = vmatprep.subr.mxu0 0.0
    %1394 = vmatpush1.msra.mxu0 0.0
    %1395 = vmatprep.subr.mxu0 0.0
    %1396 = vmatpush1.msra.mxu0 0.0
    %1397 = vmatprep.subr.mxu0 0.0
    %1398 = vmatpush1.msra.mxu0 0.0
    %1399 = vmatprep.subr.mxu0 0.0
    %1400 = vmatpush1.msra.mxu0 0.0
    %1401 = vmatprep.subr.mxu0 0.0
    %1402 = vmatpush1.msra.mxu0 0.0
    %1403 = vmatprep.subr.mxu0 0.0
    %1404 = vmatpush1.msra.mxu0 0.0
    %1405 = vmatprep.subr.mxu0 0.0
    %1406 = vmatpush1.msra.mxu0 0.0
    %1407 = vmatprep.subr.mxu0 0.0
    %1408 = vmatpush1.msra.mxu0 0.0
    %1409 = vmatprep.subr.mxu0 0.0
    %1410 = vmatpush1.msra.mxu0 0.0
    %1411 = vmatprep.subr.mxu0 0.0
    %1412 = vmatpush1.msra.mxu0 0.0
    %1413 = vmatprep.subr.mxu0 0.0
    %1414 = vmatpush1.msra.mxu0 0.0
    %1415 = vmatprep.subr.mxu0 0.0
    %1416 = vmatpush1.msra.mxu0 0.0
    %1417 = vmatprep.subr.mxu0 0.0
    %1418 = vmatpush1.msra.mxu0 0.0
    %1419 = vmatprep.subr.mxu0 0.0
    %1420 = vmatpush1.msra.mxu0 0.0
    %1421 = vmatprep.subr.mxu0 %v1390
    %1422 = vmatpush1.msra.mxu0 %v1389
    %1423 = vmatprep.subr.mxu0 0.0
    %1424 = vmatpush2.msra.mxu0 0.0
    %1425 = vmatprep.subr.mxu0 0.0
    %1426 = vmatpush2.msra.mxu0 0.0
    %1427 = vmatprep.subr.mxu0 0.0
    %1428 = vmatpush2.msra.mxu0 0.0
    %1429 = vmatprep.subr.mxu0 0.0
    %1430 = vmatpush2.msra.mxu0 0.0
    %1431 = vmatprep.subr.mxu0 0.0
    %1432 = vmatpush2.msra.mxu0 0.0
    %1433 = vmatprep.subr.mxu0 0.0
    %1434 = vmatpush2.msra.mxu0 0.0
    %1435 = vmatprep.subr.mxu0 0.0
    %1436 = vmatpush2.msra.mxu0 0.0
    %1437 = vmatprep.subr.mxu0 0.0
    %1438 = vmatpush2.msra.mxu0 0.0
    %1439 = vmatprep.subr.mxu0 0.0
    %1440 = vmatpush2.msra.mxu0 0.0
    %1441 = vmatprep.subr.mxu0 0.0
    %1442 = vmatpush2.msra.mxu0 0.0
    %1443 = vmatprep.subr.mxu0 0.0
    %1444 = vmatpush2.msra.mxu0 0.0
    %1445 = vmatprep.subr.mxu0 0.0
    %1446 = vmatpush2.msra.mxu0 0.0
    %1447 = vmatprep.subr.mxu0 0.0
    %1448 = vmatpush2.msra.mxu0 0.0
    %1449 = vmatprep.subr.mxu0 0.0
    %1450 = vmatpush2.msra.mxu0 0.0
    %1451 = vmatprep.subr.mxu0 0.0
    %1452 = vmatpush2.msra.mxu0 0.0
    %1453 = vmatprep.subr.mxu0 0.0
    %1454 = vmatpush2.msra.mxu0 0.0
    %1455 = vmatprep.mubr.f32.mxu0 0.0
    %1456 = vmatmul.mubr.f32.gmra.mxu0 %v104
    %v1457 = vpop.f32.mrf.mxu0
    %v1458 = vadd.f32 %v100, %v1457
    %v1459 = vpop.f32.mrf.mxu0
    %v1460 = vadd.f32 %v100, %v1459
    %1461 = vdwg.mxu0
    %v1464 = vrot.slane %v1458, 4
    %v1465 = vrot.slane %v1460, 4
    %v1468 = vmul.f32 %v1458, %v1464
    %v1469 = vmul.f32 %v1460, %v1465
    %v1471 = vsel %vm94, %v1468, 0
    %v1474 = vsel %vm94, %v1469, 0
    %1476 = vmatprep.subr.mxu0 0.0
    %1477 = vmatpush1.msra.mxu0 0.0
    %1478 = vmatprep.subr.mxu0 0.0
    %1479 = vmatpush1.msra.mxu0 0.0
    %1480 = vmatprep.subr.mxu0 0.0
    %1481 = vmatpush1.msra.mxu0 0.0
    %1482 = vmatprep.subr.mxu0 0.0
    %1483 = vmatpush1.msra.mxu0 0.0
    %1484 = vmatprep.subr.mxu0 0.0
    %1485 = vmatpush1.msra.mxu0 0.0
    %1486 = vmatprep.subr.mxu0 0.0
    %1487 = vmatpush1.msra.mxu0 0.0
    %1488 = vmatprep.subr.mxu0 0.0
    %1489 = vmatpush1.msra.mxu0 0.0
    %1490 = vmatprep.subr.mxu0 0.0
    %1491 = vmatpush1.msra.mxu0 0.0
    %1492 = vmatprep.subr.mxu0 0.0
    %1493 = vmatpush1.msra.mxu0 0.0
    %1494 = vmatprep.subr.mxu0 0.0
    %1495 = vmatpush1.msra.mxu0 0.0
    %1496 = vmatprep.subr.mxu0 0.0
    %1497 = vmatpush1.msra.mxu0 0.0
    %1498 = vmatprep.subr.mxu0 0.0
    %1499 = vmatpush1.msra.mxu0 0.0
    %1500 = vmatprep.subr.mxu0 0.0
    %1501 = vmatpush1.msra.mxu0 0.0
    %1502 = vmatprep.subr.mxu0 0.0
    %1503 = vmatpush1.msra.mxu0 0.0
    %1504 = vmatprep.subr.mxu0 0.0
    %1505 = vmatpush1.msra.mxu0 0.0
    %1506 = vmatprep.subr.mxu0 %v1474
    %1507 = vmatpush1.msra.mxu0 %v1471
    %1508 = vmatprep.subr.mxu0 0.0
    %1509 = vmatpush2.msra.mxu0 0.0
    %1510 = vmatprep.subr.mxu0 0.0
    %1511 = vmatpush2.msra.mxu0 0.0
    %1512 = vmatprep.subr.mxu0 0.0
    %1513 = vmatpush2.msra.mxu0 0.0
    %1514 = vmatprep.subr.mxu0 0.0
    %1515 = vmatpush2.msra.mxu0 0.0
    %1516 = vmatprep.subr.mxu0 0.0
    %1517 = vmatpush2.msra.mxu0 0.0
    %1518 = vmatprep.subr.mxu0 0.0
    %1519 = vmatpush2.msra.mxu0 0.0
    %1520 = vmatprep.subr.mxu0 0.0
    %1521 = vmatpush2.msra.mxu0 0.0
    %1522 = vmatprep.subr.mxu0 0.0
    %1523 = vmatpush2.msra.mxu0 0.0
    %1524 = vmatprep.subr.mxu0 0.0
    %1525 = vmatpush2.msra.mxu0 0.0
    %1526 = vmatprep.subr.mxu0 0.0
    %1527 = vmatpush2.msra.mxu0 0.0
    %1528 = vmatprep.subr.mxu0 0.0
    %1529 = vmatpush2.msra.mxu0 0.0
    %1530 = vmatprep.subr.mxu0 0.0
    %1531 = vmatpush2.msra.mxu0 0.0
    %1532 = vmatprep.subr.mxu0 0.0
    %1533 = vmatpush2.msra.mxu0 0.0
    %1534 = vmatprep.subr.mxu0 0.0
    %1535 = vmatpush2.msra.mxu0 0.0
    %1536 = vmatprep.subr.mxu0 0.0
    %1537 = vmatpush2.msra.mxu0 0.0
    %1538 = vmatprep.subr.mxu0 0.0
    %1539 = vmatpush2.msra.mxu0 0.0
    %1540 = vmatprep.mubr.f32.mxu0 0.0
    %1541 = vmatmul.mubr.f32.gmra.mxu0 %v197
    %v1542 = vpop.f32.mrf.mxu0
    %v1543 = vadd.f32 %v188, %v1542
    %v1544 = vpop.f32.mrf.mxu0
    %v1545 = vadd.f32 %v188, %v1544
    %1546 = vmatprep.mubr.f32.mxu0 0.0
    %1547 = vmatmul.mubr.f32.gmra.mxu0 %v200
    %v1548 = vpop.f32.mrf.mxu0
    %v1549 = vadd.f32 %v193, %v1548
    %v1550 = vpop.f32.mrf.mxu0
    %v1551 = vadd.f32 %v193, %v1550
    %1552 = vdwg.mxu0
    %1553 = vst [vmem:[#allocation2 + $0x8] sm:$0xff] %v1543
    %1554 = vst [vmem:[#allocation2 + $0x10] sm:$0xff] %v1545
    %1555 = vst [vmem:[#allocation2 + $0x28] sm:$0xf] %v1549
    %1556 = vst [vmem:[#allocation2 + $0x30] sm:$0xf] %v1551
    %v1557 = vld [vmem:[#allocation2] sm:$0xff]
    %v1558 = vld [vmem:[#allocation2 + $0x8] sm:$0xff]
    %v1559 = vld [vmem:[#allocation2 + $0x10] sm:$0xff]
    %v1560 = vld [vmem:[#allocation2 + $0x20] sm:$0xf]
    %v1561 = vld [vmem:[#allocation2 + $0x28] sm:$0xf]
    %v1562 = vld [vmem:[#allocation2 + $0x30] sm:$0xf]
    %1569 = vrot.lane.b32.xlu0 %v1557, 17
    %v1570 = vpop.permute.xlu0 %1569
    %1571 = vrot.lane.b32.xlu0 %v1558, 17
    %v1572 = vpop.permute.xlu0 %1571
    %1573 = vrot.lane.b32.xlu0 %v1559, 17
    %v1574 = vpop.permute.xlu0 %1573
    %1575 = vrot.lane.b32.xlu0 %v1560, 17
    %v1576 = vpop.permute.xlu0 %1575
    %1577 = vrot.lane.b32.xlu0 %v1561, 17
    %v1578 = vpop.permute.xlu0 %1577
    %1579 = vrot.lane.b32.xlu0 %v1562, 17
    %v1580 = vpop.permute.xlu0 %1579
    %v1581 = vsel %vm317, %v1570, %v1572
    %v1582 = vsel %vm317, %v1572, %v1574
    %v1583 = vsel %vm317, %v1576, %v1578
    %v1584 = vsel %vm317, %v1578, %v1580
    %v1589 = vsel %vm297, %v1581, 0.0
    %v1590 = vsel %vm298, %v1582, 0.0
    %v1591 = vsel %vm297, %v1583, 0.0
    %v1592 = vsel %vm298, %v1584, 0.0
    %v1593 = vld [vmem:[#allocation3] sm:$0xff]
    %v1594 = vld [vmem:[#allocation3 + $0x8] sm:$0xf]
    %v1595 = vld [vmem:[%s332] sm:$0xff]
    %v1596 = vld [vmem:[%s332 + $0x8] sm:$0xf]
    %1597 = vrot.lane.b32.xlu0 %v1557, 16
    %v1598 = vpop.permute.xlu0 %1597
    %1599 = vrot.lane.b32.xlu0 %v1558, 16
    %v1600 = vpop.permute.xlu0 %1599
    %1601 = vrot.lane.b32.xlu0 %v1559, 16
    %v1602 = vpop.permute.xlu0 %1601
    %1603 = vrot.lane.b32.xlu0 %v1560, 16
    %v1604 = vpop.permute.xlu0 %1603
    %1605 = vrot.lane.b32.xlu0 %v1561, 16
    %v1606 = vpop.permute.xlu0 %1605
    %1607 = vrot.lane.b32.xlu0 %v1562, 16
    %v1608 = vpop.permute.xlu0 %1607
    %v1609 = vsel %vm347, %v1598, %v1600
    %v1610 = vsel %vm347, %v1600, %v1602
    %v1611 = vsel %vm347, %v1604, %v1606
    %v1612 = vsel %vm347, %v1606, %v1608
    %v1616 = vsel %vm354, %v1595, 0
    %v1619 = vsel %vm354, %v1596, 0
    %v1621 = vsel %vm94, %v1611, 0
    %v1623 = vsel %vm94, %v1612, 0
    %1625 = vmatprep.subr.mxu0 0.0
    %1626 = vmatpush1.msra.mxu0 0.0
    %1627 = vmatprep.subr.mxu0 0.0
    %1628 = vmatpush1.msra.mxu0 0.0
    %1629 = vmatprep.subr.mxu0 0.0
    %1630 = vmatpush1.msra.mxu0 0.0
    %1631 = vmatprep.subr.mxu0 0.0
    %1632 = vmatpush1.msra.mxu0 0.0
    %1633 = vmatprep.subr.mxu0 0.0
    %1634 = vmatpush1.msra.mxu0 0.0
    %1635 = vmatprep.subr.mxu0 0.0
    %1636 = vmatpush1.msra.mxu0 0.0
    %1637 = vmatprep.subr.mxu0 0.0
    %1638 = vmatpush1.msra.mxu0 0.0
    %1639 = vmatprep.subr.mxu0 0.0
    %1640 = vmatpush1.msra.mxu0 0.0
    %1641 = vmatprep.subr.mxu0 0.0
    %1642 = vmatpush1.msra.mxu0 0.0
    %1643 = vmatprep.subr.mxu0 0.0
    %1644 = vmatpush1.msra.mxu0 0.0
    %1645 = vmatprep.subr.mxu0 0.0
    %1646 = vmatpush1.msra.mxu0 0.0
    %1647 = vmatprep.subr.mxu0 0.0
    %1648 = vmatpush1.msra.mxu0 0.0
    %1649 = vmatprep.subr.mxu0 0.0
    %1650 = vmatpush1.msra.mxu0 0.0
    %1651 = vmatprep.subr.mxu0 0.0
    %1652 = vmatpush1.msra.mxu0 0.0
    %1653 = vmatprep.subr.mxu0 %v1623
    %1654 = vmatpush1.msra.mxu0 %v1621
    %1655 = vmatprep.subr.mxu0 %v1610
    %1656 = vmatpush1.msra.mxu0 %v1609
    %1657 = vmatprep.subr.mxu0 0.0
    %1658 = vmatpush2.msra.mxu0 0.0
    %1659 = vmatprep.subr.mxu0 0.0
    %1660 = vmatpush2.msra.mxu0 0.0
    %1661 = vmatprep.subr.mxu0 0.0
    %1662 = vmatpush2.msra.mxu0 0.0
    %1663 = vmatprep.subr.mxu0 0.0
    %1664 = vmatpush2.msra.mxu0 0.0
    %1665 = vmatprep.subr.mxu0 0.0
    %1666 = vmatpush2.msra.mxu0 0.0
    %1667 = vmatprep.subr.mxu0 0.0
    %1668 = vmatpush2.msra.mxu0 0.0
    %1669 = vmatprep.subr.mxu0 0.0
    %1670 = vmatpush2.msra.mxu0 0.0
    %1671 = vmatprep.subr.mxu0 0.0
    %1672 = vmatpush2.msra.mxu0 0.0
    %1673 = vmatprep.subr.mxu0 0.0
    %1674 = vmatpush2.msra.mxu0 0.0
    %1675 = vmatprep.subr.mxu0 0.0
    %1676 = vmatpush2.msra.mxu0 0.0
    %1677 = vmatprep.subr.mxu0 0.0
    %1678 = vmatpush2.msra.mxu0 0.0
    %1679 = vmatprep.subr.mxu0 0.0
    %1680 = vmatpush2.msra.mxu0 0.0
    %1681 = vmatprep.subr.mxu0 0.0
    %1682 = vmatpush2.msra.mxu0 0.0
    %1683 = vmatprep.subr.mxu0 0.0
    %1684 = vmatpush2.msra.mxu0 0.0
    %1685 = vmatprep.subr.mxu0 0.0
    %1686 = vmatpush2.msra.mxu0 0.0
    %1687 = vmatprep.subr.mxu0 0.0
    %1688 = vmatpush2.msra.mxu0 0.0
    %1689 = vmatprep.mubr.f32.mxu0 0.0
    %1690 = vmatmul.mubr.f32.gmra.mxu0 %v1616
    %v1691 = vpop.f32.mrf.mxu0
    %v1692 = vadd.f32 0.0, %v1691
    %v1693 = vpop.f32.mrf.mxu0
    %v1694 = vadd.f32 0.0, %v1693
    %1695 = vmatprep.mubr.f32.mxu0 0.0
    %1696 = vmatmul.mubr.f32.gmra.mxu0 %v1619
    %v1697 = vpop.f32.mrf.mxu0
    %v1698 = vadd.f32 0.0, %v1697
    %v1699 = vpop.f32.mrf.mxu0
    %v1700 = vadd.f32 0.0, %v1699
    %1701 = vdwg.mxu0
    %v1703 = vsel %vm354, %v1593, 0
    %v1706 = vsel %vm354, %v1594, 0
    %v1709 = vsel %vm94, %v1591, 0
    %v1712 = vsel %vm94, %v1592, 0
    %1714 = vmatprep.subr.mxu0 0.0
    %1715 = vmatpush1.msra.mxu0 0.0
    %1716 = vmatprep.subr.mxu0 0.0
    %1717 = vmatpush1.msra.mxu0 0.0
    %1718 = vmatprep.subr.mxu0 0.0
    %1719 = vmatpush1.msra.mxu0 0.0
    %1720 = vmatprep.subr.mxu0 0.0
    %1721 = vmatpush1.msra.mxu0 0.0
    %1722 = vmatprep.subr.mxu0 0.0
    %1723 = vmatpush1.msra.mxu0 0.0
    %1724 = vmatprep.subr.mxu0 0.0
    %1725 = vmatpush1.msra.mxu0 0.0
    %1726 = vmatprep.subr.mxu0 0.0
    %1727 = vmatpush1.msra.mxu0 0.0
    %1728 = vmatprep.subr.mxu0 0.0
    %1729 = vmatpush1.msra.mxu0 0.0
    %1730 = vmatprep.subr.mxu0 0.0
    %1731 = vmatpush1.msra.mxu0 0.0
    %1732 = vmatprep.subr.mxu0 0.0
    %1733 = vmatpush1.msra.mxu0 0.0
    %1734 = vmatprep.subr.mxu0 0.0
    %1735 = vmatpush1.msra.mxu0 0.0
    %1736 = vmatprep.subr.mxu0 0.0
    %1737 = vmatpush1.msra.mxu0 0.0
    %1738 = vmatprep.subr.mxu0 0.0
    %1739 = vmatpush1.msra.mxu0 0.0
    %1740 = vmatprep.subr.mxu0 0.0
    %1741 = vmatpush1.msra.mxu0 0.0
    %1742 = vmatprep.subr.mxu0 %v1712
    %1743 = vmatpush1.msra.mxu0 %v1709
    %1744 = vmatprep.subr.mxu0 %v1590
    %1745 = vmatpush1.msra.mxu0 %v1589
    %1746 = vmatprep.subr.mxu0 0.0
    %1747 = vmatpush2.msra.mxu0 0.0
    %1748 = vmatprep.subr.mxu0 0.0
    %1749 = vmatpush2.msra.mxu0 0.0
    %1750 = vmatprep.subr.mxu0 0.0
    %1751 = vmatpush2.msra.mxu0 0.0
    %1752 = vmatprep.subr.mxu0 0.0
    %1753 = vmatpush2.msra.mxu0 0.0
    %1754 = vmatprep.subr.mxu0 0.0
    %1755 = vmatpush2.msra.mxu0 0.0
    %1756 = vmatprep.subr.mxu0 0.0
    %1757 = vmatpush2.msra.mxu0 0.0
    %1758 = vmatprep.subr.mxu0 0.0
    %1759 = vmatpush2.msra.mxu0 0.0
    %1760 = vmatprep.subr.mxu0 0.0
    %1761 = vmatpush2.msra.mxu0 0.0
    %1762 = vmatprep.subr.mxu0 0.0
    %1763 = vmatpush2.msra.mxu0 0.0
    %1764 = vmatprep.subr.mxu0 0.0
    %1765 = vmatpush2.msra.mxu0 0.0
    %1766 = vmatprep.subr.mxu0 0.0
    %1767 = vmatpush2.msra.mxu0 0.0
    %1768 = vmatprep.subr.mxu0 0.0
    %1769 = vmatpush2.msra.mxu0 0.0
    %1770 = vmatprep.subr.mxu0 0.0
    %1771 = vmatpush2.msra.mxu0 0.0
    %1772 = vmatprep.subr.mxu0 0.0
    %1773 = vmatpush2.msra.mxu0 0.0
    %1774 = vmatprep.subr.mxu0 0.0
    %1775 = vmatpush2.msra.mxu0 0.0
    %1776 = vmatprep.subr.mxu0 0.0
    %1777 = vmatpush2.msra.mxu0 0.0
    %1778 = vmatprep.mubr.f32.mxu0 0.0
    %1779 = vmatmul.mubr.f32.gmra.mxu0 %v1703
    %v1780 = vpop.f32.mrf.mxu0
    %v1781 = vadd.f32 %v1692, %v1780
    %v1782 = vpop.f32.mrf.mxu0
    %v1783 = vadd.f32 %v1694, %v1782
    %1784 = vmatprep.mubr.f32.mxu0 0.0
    %1785 = vmatmul.mubr.f32.gmra.mxu0 %v1706
    %v1786 = vpop.f32.mrf.mxu0
    %v1787 = vadd.f32 %v1698, %v1786
    %v1788 = vpop.f32.mrf.mxu0
    %v1789 = vadd.f32 %v1700, %v1788
    %1790 = vdwg.mxu0
    %1791 = vrot.lane.b32.xlu0 %v1557, 15
    %v1792 = vpop.permute.xlu0 %1791
    %1793 = vrot.lane.b32.xlu0 %v1558, 15
    %v1794 = vpop.permute.xlu0 %1793
    %1795 = vrot.lane.b32.xlu0 %v1559, 15
    %v1796 = vpop.permute.xlu0 %1795
    %1797 = vrot.lane.b32.xlu0 %v1560, 15
    %v1798 = vpop.permute.xlu0 %1797
    %1799 = vrot.lane.b32.xlu0 %v1561, 15
    %v1800 = vpop.permute.xlu0 %1799
    %1801 = vrot.lane.b32.xlu0 %v1562, 15
    %v1802 = vpop.permute.xlu0 %1801
    %v1803 = vsel %vm547, %v1792, %v1794
    %v1804 = vsel %vm547, %v1794, %v1796
    %v1805 = vsel %vm547, %v1798, %v1800
    %v1806 = vsel %vm547, %v1800, %v1802
    %v1811 = vsel %vm533, %v1803, 0.0
    %v1812 = vsel %vm534, %v1804, 0.0
    %v1813 = vsel %vm533, %v1805, 0.0
    %v1814 = vsel %vm534, %v1806, 0.0
    %v1815 = vld [vmem:[%s560] sm:$0xff]
    %v1816 = vld [vmem:[%s560 + $0x8] sm:$0xf]
    %v1818 = vsel %vm354, %v1815, 0
    %v1821 = vsel %vm354, %v1816, 0
    %v1824 = vsel %vm94, %v1813, 0
    %v1827 = vsel %vm94, %v1814, 0
    %1829 = vmatprep.subr.mxu0 0.0
    %1830 = vmatpush1.msra.mxu0 0.0
    %1831 = vmatprep.subr.mxu0 0.0
    %1832 = vmatpush1.msra.mxu0 0.0
    %1833 = vmatprep.subr.mxu0 0.0
    %1834 = vmatpush1.msra.mxu0 0.0
    %1835 = vmatprep.subr.mxu0 0.0
    %1836 = vmatpush1.msra.mxu0 0.0
    %1837 = vmatprep.subr.mxu0 0.0
    %1838 = vmatpush1.msra.mxu0 0.0
    %1839 = vmatprep.subr.mxu0 0.0
    %1840 = vmatpush1.msra.mxu0 0.0
    %1841 = vmatprep.subr.mxu0 0.0
    %1842 = vmatpush1.msra.mxu0 0.0
    %1843 = vmatprep.subr.mxu0 0.0
    %1844 = vmatpush1.msra.mxu0 0.0
    %1845 = vmatprep.subr.mxu0 0.0
    %1846 = vmatpush1.msra.mxu0 0.0
    %1847 = vmatprep.subr.mxu0 0.0
    %1848 = vmatpush1.msra.mxu0 0.0
    %1849 = vmatprep.subr.mxu0 0.0
    %1850 = vmatpush1.msra.mxu0 0.0
    %1851 = vmatprep.subr.mxu0 0.0
    %1852 = vmatpush1.msra.mxu0 0.0
    %1853 = vmatprep.subr.mxu0 0.0
    %1854 = vmatpush1.msra.mxu0 0.0
    %1855 = vmatprep.subr.mxu0 0.0
    %1856 = vmatpush1.msra.mxu0 0.0
    %1857 = vmatprep.subr.mxu0 %v1827
    %1858 = vmatpush1.msra.mxu0 %v1824
    %1859 = vmatprep.subr.mxu0 %v1812
    %1860 = vmatpush1.msra.mxu0 %v1811
    %1861 = vmatprep.subr.mxu0 0.0
    %1862 = vmatpush2.msra.mxu0 0.0
    %1863 = vmatprep.subr.mxu0 0.0
    %1864 = vmatpush2.msra.mxu0 0.0
    %1865 = vmatprep.subr.mxu0 0.0
    %1866 = vmatpush2.msra.mxu0 0.0
    %1867 = vmatprep.subr.mxu0 0.0
    %1868 = vmatpush2.msra.mxu0 0.0
    %1869 = vmatprep.subr.mxu0 0.0
    %1870 = vmatpush2.msra.mxu0 0.0
    %1871 = vmatprep.subr.mxu0 0.0
    %1872 = vmatpush2.msra.mxu0 0.0
    %1873 = vmatprep.subr.mxu0 0.0
    %1874 = vmatpush2.msra.mxu0 0.0
    %1875 = vmatprep.subr.mxu0 0.0
    %1876 = vmatpush2.msra.mxu0 0.0
    %1877 = vmatprep.subr.mxu0 0.0
    %1878 = vmatpush2.msra.mxu0 0.0
    %1879 = vmatprep.subr.mxu0 0.0
    %1880 = vmatpush2.msra.mxu0 0.0
    %1881 = vmatprep.subr.mxu0 0.0
    %1882 = vmatpush2.msra.mxu0 0.0
    %1883 = vmatprep.subr.mxu0 0.0
    %1884 = vmatpush2.msra.mxu0 0.0
    %1885 = vmatprep.subr.mxu0 0.0
    %1886 = vmatpush2.msra.mxu0 0.0
    %1887 = vmatprep.subr.mxu0 0.0
    %1888 = vmatpush2.msra.mxu0 0.0
    %1889 = vmatprep.subr.mxu0 0.0
    %1890 = vmatpush2.msra.mxu0 0.0
    %1891 = vmatprep.subr.mxu0 0.0
    %1892 = vmatpush2.msra.mxu0 0.0
    %1893 = vmatprep.mubr.f32.mxu0 0.0
    %1894 = vmatmul.mubr.f32.gmra.mxu0 %v1818
    %v1895 = vpop.f32.mrf.mxu0
    %v1896 = vadd.f32 0.0, %v1895
    %v1897 = vpop.f32.mrf.mxu0
    %v1898 = vadd.f32 0.0, %v1897
    %1899 = vmatprep.mubr.f32.mxu0 0.0
    %1900 = vmatmul.mubr.f32.gmra.mxu0 %v1821
    %v1901 = vpop.f32.mrf.mxu0
    %v1902 = vadd.f32 0.0, %v1901
    %v1903 = vpop.f32.mrf.mxu0
    %v1904 = vadd.f32 0.0, %v1903
    %1905 = vdwg.mxu0
    %v1906 = vadd.f32 %v1781, %v1896
    %v1907 = vadd.f32 %v1783, %v1898
    %v1908 = vadd.f32 %v1787, %v1902
    %v1909 = vadd.f32 %v1789, %v1904
    %1910 = vrot.lane.b32.xlu0 %v1557, 1
    %v1911 = vpop.permute.xlu0 %1910
    %1912 = vrot.lane.b32.xlu0 %v1558, 1
    %v1913 = vpop.permute.xlu0 %1912
    %1914 = vrot.lane.b32.xlu0 %v1559, 1
    %v1915 = vpop.permute.xlu0 %1914
    %1916 = vrot.lane.b32.xlu0 %v1560, 1
    %v1917 = vpop.permute.xlu0 %1916
    %1918 = vrot.lane.b32.xlu0 %v1561, 1
    %v1919 = vpop.permute.xlu0 %1918
    %1920 = vrot.lane.b32.xlu0 %v1562, 1
    %v1921 = vpop.permute.xlu0 %1920
    %v1922 = vsel %vm668, %v1911, %v1913
    %v1923 = vsel %vm668, %v1913, %v1915
    %v1924 = vsel %vm668, %v1917, %v1919
    %v1925 = vsel %vm668, %v1919, %v1921
    %v1930 = vsel %vm297, %v1922, 0.0
    %v1931 = vsel %vm298, %v1923, 0.0
    %v1932 = vsel %vm297, %v1924, 0.0
    %v1933 = vsel %vm298, %v1925, 0.0
    %v1934 = vld [vmem:[%s681] sm:$0xff]
    %v1935 = vld [vmem:[%s681 + $0x8] sm:$0xf]
    %v1937 = vsel %vm354, %v1934, 0
    %v1940 = vsel %vm354, %v1935, 0
    %v1943 = vsel %vm94, %v1932, 0
    %v1946 = vsel %vm94, %v1933, 0
    %1948 = vmatprep.subr.mxu0 0.0
    %1949 = vmatpush1.msra.mxu0 0.0
    %1950 = vmatprep.subr.mxu0 0.0
    %1951 = vmatpush1.msra.mxu0 0.0
    %1952 = vmatprep.subr.mxu0 0.0
    %1953 = vmatpush1.msra.mxu0 0.0
    %1954 = vmatprep.subr.mxu0 0.0
    %1955 = vmatpush1.msra.mxu0 0.0
    %1956 = vmatprep.subr.mxu0 0.0
    %1957 = vmatpush1.msra.mxu0 0.0
    %1958 = vmatprep.subr.mxu0 0.0
    %1959 = vmatpush1.msra.mxu0 0.0
    %1960 = vmatprep.subr.mxu0 0.0
    %1961 = vmatpush1.msra.mxu0 0.0
    %1962 = vmatprep.subr.mxu0 0.0
    %1963 = vmatpush1.msra.mxu0 0.0
    %1964 = vmatprep.subr.mxu0 0.0
    %1965 = vmatpush1.msra.mxu0 0.0
    %1966 = vmatprep.subr.mxu0 0.0
    %1967 = vmatpush1.msra.mxu0 0.0
    %1968 = vmatprep.subr.mxu0 0.0
    %1969 = vmatpush1.msra.mxu0 0.0
    %1970 = vmatprep.subr.mxu0 0.0
    %1971 = vmatpush1.msra.mxu0 0.0
    %1972 = vmatprep.subr.mxu0 0.0
    %1973 = vmatpush1.msra.mxu0 0.0
    %1974 = vmatprep.subr.mxu0 0.0
    %1975 = vmatpush1.msra.mxu0 0.0
    %1976 = vmatprep.subr.mxu0 %v1946
    %1977 = vmatpush1.msra.mxu0 %v1943
    %1978 = vmatprep.subr.mxu0 %v1931
    %1979 = vmatpush1.msra.mxu0 %v1930
    %1980 = vmatprep.subr.mxu0 0.0
    %1981 = vmatpush2.msra.mxu0 0.0
    %1982 = vmatprep.subr.mxu0 0.0
    %1983 = vmatpush2.msra.mxu0 0.0
    %1984 = vmatprep.subr.mxu0 0.0
    %1985 = vmatpush2.msra.mxu0 0.0
    %1986 = vmatprep.subr.mxu0 0.0
    %1987 = vmatpush2.msra.mxu0 0.0
    %1988 = vmatprep.subr.mxu0 0.0
    %1989 = vmatpush2.msra.mxu0 0.0
    %1990 = vmatprep.subr.mxu0 0.0
    %1991 = vmatpush2.msra.mxu0 0.0
    %1992 = vmatprep.subr.mxu0 0.0
    %1993 = vmatpush2.msra.mxu0 0.0
    %1994 = vmatprep.subr.mxu0 0.0
    %1995 = vmatpush2.msra.mxu0 0.0
    %1996 = vmatprep.subr.mxu0 0.0
    %1997 = vmatpush2.msra.mxu0 0.0
    %1998 = vmatprep.subr.mxu0 0.0
    %1999 = vmatpush2.msra.mxu0 0.0
    %2000 = vmatprep.subr.mxu0 0.0
    %2001 = vmatpush2.msra.mxu0 0.0
    %2002 = vmatprep.subr.mxu0 0.0
    %2003 = vmatpush2.msra.mxu0 0.0
    %2004 = vmatprep.subr.mxu0 0.0
    %2005 = vmatpush2.msra.mxu0 0.0
    %2006 = vmatprep.subr.mxu0 0.0
    %2007 = vmatpush2.msra.mxu0 0.0
    %2008 = vmatprep.subr.mxu0 0.0
    %2009 = vmatpush2.msra.mxu0 0.0
    %2010 = vmatprep.subr.mxu0 0.0
    %2011 = vmatpush2.msra.mxu0 0.0
    %2012 = vmatprep.mubr.f32.mxu0 0.0
    %2013 = vmatmul.mubr.f32.gmra.mxu0 %v1937
    %v2014 = vpop.f32.mrf.mxu0
    %v2015 = vadd.f32 0.0, %v2014
    %v2016 = vpop.f32.mrf.mxu0
    %v2017 = vadd.f32 0.0, %v2016
    %2018 = vmatprep.mubr.f32.mxu0 0.0
    %2019 = vmatmul.mubr.f32.gmra.mxu0 %v1940
    %v2020 = vpop.f32.mrf.mxu0
    %v2021 = vadd.f32 0.0, %v2020
    %v2022 = vpop.f32.mrf.mxu0
    %v2023 = vadd.f32 0.0, %v2022
    %2024 = vdwg.mxu0
    %v2025 = vadd.f32 %v1906, %v2015
    %v2026 = vadd.f32 %v1907, %v2017
    %v2027 = vadd.f32 %v1908, %v2021
    %v2028 = vadd.f32 %v1909, %v2023
    %v2029 = vld [vmem:[%s777] sm:$0xff]
    %v2030 = vld [vmem:[%s777 + $0x8] sm:$0xf]
    %v2032 = vsel %vm354, %v2029, 0
    %v2035 = vsel %vm354, %v2030, 0
    %v2038 = vsel %vm94, %v1549, 0
    %v2041 = vsel %vm94, %v1551, 0
    %2043 = vmatprep.subr.mxu0 0.0
    %2044 = vmatpush1.msra.mxu0 0.0
    %2045 = vmatprep.subr.mxu0 0.0
    %2046 = vmatpush1.msra.mxu0 0.0
    %2047 = vmatprep.subr.mxu0 0.0
    %2048 = vmatpush1.msra.mxu0 0.0
    %2049 = vmatprep.subr.mxu0 0.0
    %2050 = vmatpush1.msra.mxu0 0.0
    %2051 = vmatprep.subr.mxu0 0.0
    %2052 = vmatpush1.msra.mxu0 0.0
    %2053 = vmatprep.subr.mxu0 0.0
    %2054 = vmatpush1.msra.mxu0 0.0
    %2055 = vmatprep.subr.mxu0 0.0
    %2056 = vmatpush1.msra.mxu0 0.0
    %2057 = vmatprep.subr.mxu0 0.0
    %2058 = vmatpush1.msra.mxu0 0.0
    %2059 = vmatprep.subr.mxu0 0.0
    %2060 = vmatpush1.msra.mxu0 0.0
    %2061 = vmatprep.subr.mxu0 0.0
    %2062 = vmatpush1.msra.mxu0 0.0
    %2063 = vmatprep.subr.mxu0 0.0
    %2064 = vmatpush1.msra.mxu0 0.0
    %2065 = vmatprep.subr.mxu0 0.0
    %2066 = vmatpush1.msra.mxu0 0.0
    %2067 = vmatprep.subr.mxu0 0.0
    %2068 = vmatpush1.msra.mxu0 0.0
    %2069 = vmatprep.subr.mxu0 0.0
    %2070 = vmatpush1.msra.mxu0 0.0
    %2071 = vmatprep.subr.mxu0 %v2041
    %2072 = vmatpush1.msra.mxu0 %v2038
    %2073 = vmatprep.subr.mxu0 %v1545
    %2074 = vmatpush1.msra.mxu0 %v1543
    %2075 = vmatprep.subr.mxu0 0.0
    %2076 = vmatpush2.msra.mxu0 0.0
    %2077 = vmatprep.subr.mxu0 0.0
    %2078 = vmatpush2.msra.mxu0 0.0
    %2079 = vmatprep.subr.mxu0 0.0
    %2080 = vmatpush2.msra.mxu0 0.0
    %2081 = vmatprep.subr.mxu0 0.0
    %2082 = vmatpush2.msra.mxu0 0.0
    %2083 = vmatprep.subr.mxu0 0.0
    %2084 = vmatpush2.msra.mxu0 0.0
    %2085 = vmatprep.subr.mxu0 0.0
    %2086 = vmatpush2.msra.mxu0 0.0
    %2087 = vmatprep.subr.mxu0 0.0
    %2088 = vmatpush2.msra.mxu0 0.0
    %2089 = vmatprep.subr.mxu0 0.0
    %2090 = vmatpush2.msra.mxu0 0.0
    %2091 = vmatprep.subr.mxu0 0.0
    %2092 = vmatpush2.msra.mxu0 0.0
    %2093 = vmatprep.subr.mxu0 0.0
    %2094 = vmatpush2.msra.mxu0 0.0
    %2095 = vmatprep.subr.mxu0 0.0
    %2096 = vmatpush2.msra.mxu0 0.0
    %2097 = vmatprep.subr.mxu0 0.0
    %2098 = vmatpush2.msra.mxu0 0.0
    %2099 = vmatprep.subr.mxu0 0.0
    %2100 = vmatpush2.msra.mxu0 0.0
    %2101 = vmatprep.subr.mxu0 0.0
    %2102 = vmatpush2.msra.mxu0 0.0
    %2103 = vmatprep.subr.mxu0 0.0
    %2104 = vmatpush2.msra.mxu0 0.0
    %2105 = vmatprep.subr.mxu0 0.0
    %2106 = vmatpush2.msra.mxu0 0.0
    %2107 = vmatprep.mubr.f32.mxu0 0.0
    %2108 = vmatmul.mubr.f32.gmra.mxu0 %v2032
    %v2109 = vpop.f32.mrf.mxu0
    %v2110 = vadd.f32 0.0, %v2109
    %v2111 = vpop.f32.mrf.mxu0
    %v2112 = vadd.f32 0.0, %v2111
    %2113 = vmatprep.mubr.f32.mxu0 0.0
    %2114 = vmatmul.mubr.f32.gmra.mxu0 %v2035
    %v2115 = vpop.f32.mrf.mxu0
    %v2116 = vadd.f32 0.0, %v2115
    %v2117 = vpop.f32.mrf.mxu0
    %v2118 = vadd.f32 0.0, %v2117
    %2119 = vdwg.mxu0
    %v2120 = vadd.f32 %v2025, %v2110
    %v2121 = vadd.f32 %v2026, %v2112
    %v2122 = vadd.f32 %v2027, %v2116
    %v2123 = vadd.f32 %v2028, %v2118
    %v2124 = vld [vmem:[#allocation2 + $0x8] sm:$0xff]
    %v2125 = vld [vmem:[#allocation2 + $0x10] sm:$0xff]
    %v2126 = vld [vmem:[#allocation2 + $0x18] sm:$0xff]
    %v2127 = vld [vmem:[#allocation2 + $0x28] sm:$0xf]
    %v2128 = vld [vmem:[#allocation2 + $0x30] sm:$0xf]
    %v2129 = vld [vmem:[#allocation2 + $0x38] sm:$0xf]
    %2136 = vrot.lane.b32.xlu0 %v2124, 127
    %v2137 = vpop.permute.xlu0 %2136
    %2138 = vrot.lane.b32.xlu0 %v2125, 127
    %v2139 = vpop.permute.xlu0 %2138
    %2140 = vrot.lane.b32.xlu0 %v2126, 127
    %v2141 = vpop.permute.xlu0 %2140
    %2142 = vrot.lane.b32.xlu0 %v2127, 127
    %v2143 = vpop.permute.xlu0 %2142
    %2144 = vrot.lane.b32.xlu0 %v2128, 127
    %v2145 = vpop.permute.xlu0 %2144
    %2146 = vrot.lane.b32.xlu0 %v2129, 127
    %v2147 = vpop.permute.xlu0 %2146
    %v2148 = vsel %vm897, %v2137, %v2139
    %v2149 = vsel %vm897, %v2139, %v2141
    %v2150 = vsel %vm897, %v2143, %v2145
    %v2151 = vsel %vm897, %v2145, %v2147
    %v2156 = vsel %vm533, %v2148, 0.0
    %v2157 = vsel %vm534, %v2149, 0.0
    %v2158 = vsel %vm533, %v2150, 0.0
    %v2159 = vsel %vm534, %v2151, 0.0
    %v2160 = vld [vmem:[%s910] sm:$0xff]
    %v2161 = vld [vmem:[%s910 + $0x8] sm:$0xf]
    %v2163 = vsel %vm354, %v2160, 0
    %v2166 = vsel %vm354, %v2161, 0
    %v2169 = vsel %vm94, %v2158, 0
    %v2172 = vsel %vm94, %v2159, 0
    %2174 = vmatprep.subr.mxu0 0.0
    %2175 = vmatpush1.msra.mxu0 0.0
    %2176 = vmatprep.subr.mxu0 0.0
    %2177 = vmatpush1.msra.mxu0 0.0
    %2178 = vmatprep.subr.mxu0 0.0
    %2179 = vmatpush1.msra.mxu0 0.0
    %2180 = vmatprep.subr.mxu0 0.0
    %2181 = vmatpush1.msra.mxu0 0.0
    %2182 = vmatprep.subr.mxu0 0.0
    %2183 = vmatpush1.msra.mxu0 0.0
    %2184 = vmatprep.subr.mxu0 0.0
    %2185 = vmatpush1.msra.mxu0 0.0
    %2186 = vmatprep.subr.mxu0 0.0
    %2187 = vmatpush1.msra.mxu0 0.0
    %2188 = vmatprep.subr.mxu0 0.0
    %2189 = vmatpush1.msra.mxu0 0.0
    %2190 = vmatprep.subr.mxu0 0.0
    %2191 = vmatpush1.msra.mxu0 0.0
    %2192 = vmatprep.subr.mxu0 0.0
    %2193 = vmatpush1.msra.mxu0 0.0
    %2194 = vmatprep.subr.mxu0 0.0
    %2195 = vmatpush1.msra.mxu0 0.0
    %2196 = vmatprep.subr.mxu0 0.0
    %2197 = vmatpush1.msra.mxu0 0.0
    %2198 = vmatprep.subr.mxu0 0.0
    %2199 = vmatpush1.msra.mxu0 0.0
    %2200 = vmatprep.subr.mxu0 0.0
    %2201 = vmatpush1.msra.mxu0 0.0
    %2202 = vmatprep.subr.mxu0 %v2172
    %2203 = vmatpush1.msra.mxu0 %v2169
    %2204 = vmatprep.subr.mxu0 %v2157
    %2205 = vmatpush1.msra.mxu0 %v2156
    %2206 = vmatprep.subr.mxu0 0.0
    %2207 = vmatpush2.msra.mxu0 0.0
    %2208 = vmatprep.subr.mxu0 0.0
    %2209 = vmatpush2.msra.mxu0 0.0
    %2210 = vmatprep.subr.mxu0 0.0
    %2211 = vmatpush2.msra.mxu0 0.0
    %2212 = vmatprep.subr.mxu0 0.0
    %2213 = vmatpush2.msra.mxu0 0.0
    %2214 = vmatprep.subr.mxu0 0.0
    %2215 = vmatpush2.msra.mxu0 0.0
    %2216 = vmatprep.subr.mxu0 0.0
    %2217 = vmatpush2.msra.mxu0 0.0
    %2218 = vmatprep.subr.mxu0 0.0
    %2219 = vmatpush2.msra.mxu0 0.0
    %2220 = vmatprep.subr.mxu0 0.0
    %2221 = vmatpush2.msra.mxu0 0.0
    %2222 = vmatprep.subr.mxu0 0.0
    %2223 = vmatpush2.msra.mxu0 0.0
    %2224 = vmatprep.subr.mxu0 0.0
    %2225 = vmatpush2.msra.mxu0 0.0
    %2226 = vmatprep.subr.mxu0 0.0
    %2227 = vmatpush2.msra.mxu0 0.0
    %2228 = vmatprep.subr.mxu0 0.0
    %2229 = vmatpush2.msra.mxu0 0.0
    %2230 = vmatprep.subr.mxu0 0.0
    %2231 = vmatpush2.msra.mxu0 0.0
    %2232 = vmatprep.subr.mxu0 0.0
    %2233 = vmatpush2.msra.mxu0 0.0
    %2234 = vmatprep.subr.mxu0 0.0
    %2235 = vmatpush2.msra.mxu0 0.0
    %2236 = vmatprep.subr.mxu0 0.0
    %2237 = vmatpush2.msra.mxu0 0.0
    %2238 = vmatprep.mubr.f32.mxu0 0.0
    %2239 = vmatmul.mubr.f32.gmra.mxu0 %v2163
    %v2240 = vpop.f32.mrf.mxu0
    %v2241 = vadd.f32 0.0, %v2240
    %v2242 = vpop.f32.mrf.mxu0
    %v2243 = vadd.f32 0.0, %v2242
    %2244 = vmatprep.mubr.f32.mxu0 0.0
    %2245 = vmatmul.mubr.f32.gmra.mxu0 %v2166
    %v2246 = vpop.f32.mrf.mxu0
    %v2247 = vadd.f32 0.0, %v2246
    %v2248 = vpop.f32.mrf.mxu0
    %v2249 = vadd.f32 0.0, %v2248
    %2250 = vdwg.mxu0
    %v2251 = vadd.f32 %v2120, %v2241
    %v2252 = vadd.f32 %v2121, %v2243
    %v2253 = vadd.f32 %v2122, %v2247
    %v2254 = vadd.f32 %v2123, %v2249
    %2255 = vrot.lane.b32.xlu0 %v2124, 113
    %v2256 = vpop.permute.xlu0 %2255
    %2257 = vrot.lane.b32.xlu0 %v2125, 113
    %v2258 = vpop.permute.xlu0 %2257
    %2259 = vrot.lane.b32.xlu0 %v2126, 113
    %v2260 = vpop.permute.xlu0 %2259
    %2261 = vrot.lane.b32.xlu0 %v2127, 113
    %v2262 = vpop.permute.xlu0 %2261
    %2263 = vrot.lane.b32.xlu0 %v2128, 113
    %v2264 = vpop.permute.xlu0 %2263
    %2265 = vrot.lane.b32.xlu0 %v2129, 113
    %v2266 = vpop.permute.xlu0 %2265
    %v2267 = vsel %vm1018, %v2256, %v2258
    %v2268 = vsel %vm1018, %v2258, %v2260
    %v2269 = vsel %vm1018, %v2262, %v2264
    %v2270 = vsel %vm1018, %v2264, %v2266
    %v2275 = vsel %vm297, %v2267, 0.0
    %v2276 = vsel %vm298, %v2268, 0.0
    %v2277 = vsel %vm297, %v2269, 0.0
    %v2278 = vsel %vm298, %v2270, 0.0
    %v2279 = vld [vmem:[%s1031] sm:$0xff]
    %v2280 = vld [vmem:[%s1031 + $0x8] sm:$0xf]
    %v2282 = vsel %vm354, %v2279, 0
    %v2285 = vsel %vm354, %v2280, 0
    %v2288 = vsel %vm94, %v2277, 0
    %v2291 = vsel %vm94, %v2278, 0
    %2293 = vmatprep.subr.mxu0 0.0
    %2294 = vmatpush1.msra.mxu0 0.0
    %2295 = vmatprep.subr.mxu0 0.0
    %2296 = vmatpush1.msra.mxu0 0.0
    %2297 = vmatprep.subr.mxu0 0.0
    %2298 = vmatpush1.msra.mxu0 0.0
    %2299 = vmatprep.subr.mxu0 0.0
    %2300 = vmatpush1.msra.mxu0 0.0
    %2301 = vmatprep.subr.mxu0 0.0
    %2302 = vmatpush1.msra.mxu0 0.0
    %2303 = vmatprep.subr.mxu0 0.0
    %2304 = vmatpush1.msra.mxu0 0.0
    %2305 = vmatprep.subr.mxu0 0.0
    %2306 = vmatpush1.msra.mxu0 0.0
    %2307 = vmatprep.subr.mxu0 0.0
    %2308 = vmatpush1.msra.mxu0 0.0
    %2309 = vmatprep.subr.mxu0 0.0
    %2310 = vmatpush1.msra.mxu0 0.0
    %2311 = vmatprep.subr.mxu0 0.0
    %2312 = vmatpush1.msra.mxu0 0.0
    %2313 = vmatprep.subr.mxu0 0.0
    %2314 = vmatpush1.msra.mxu0 0.0
    %2315 = vmatprep.subr.mxu0 0.0
    %2316 = vmatpush1.msra.mxu0 0.0
    %2317 = vmatprep.subr.mxu0 0.0
    %2318 = vmatpush1.msra.mxu0 0.0
    %2319 = vmatprep.subr.mxu0 0.0
    %2320 = vmatpush1.msra.mxu0 0.0
    %2321 = vmatprep.subr.mxu0 %v2291
    %2322 = vmatpush1.msra.mxu0 %v2288
    %2323 = vmatprep.subr.mxu0 %v2276
    %2324 = vmatpush1.msra.mxu0 %v2275
    %2325 = vmatprep.subr.mxu0 0.0
    %2326 = vmatpush2.msra.mxu0 0.0
    %2327 = vmatprep.subr.mxu0 0.0
    %2328 = vmatpush2.msra.mxu0 0.0
    %2329 = vmatprep.subr.mxu0 0.0
    %2330 = vmatpush2.msra.mxu0 0.0
    %2331 = vmatprep.subr.mxu0 0.0
    %2332 = vmatpush2.msra.mxu0 0.0
    %2333 = vmatprep.subr.mxu0 0.0
    %2334 = vmatpush2.msra.mxu0 0.0
    %2335 = vmatprep.subr.mxu0 0.0
    %2336 = vmatpush2.msra.mxu0 0.0
    %2337 = vmatprep.subr.mxu0 0.0
    %2338 = vmatpush2.msra.mxu0 0.0
    %2339 = vmatprep.subr.mxu0 0.0
    %2340 = vmatpush2.msra.mxu0 0.0
    %2341 = vmatprep.subr.mxu0 0.0
    %2342 = vmatpush2.msra.mxu0 0.0
    %2343 = vmatprep.subr.mxu0 0.0
    %2344 = vmatpush2.msra.mxu0 0.0
    %2345 = vmatprep.subr.mxu0 0.0
    %2346 = vmatpush2.msra.mxu0 0.0
    %2347 = vmatprep.subr.mxu0 0.0
    %2348 = vmatpush2.msra.mxu0 0.0
    %2349 = vmatprep.subr.mxu0 0.0
    %2350 = vmatpush2.msra.mxu0 0.0
    %2351 = vmatprep.subr.mxu0 0.0
    %2352 = vmatpush2.msra.mxu0 0.0
    %2353 = vmatprep.subr.mxu0 0.0
    %2354 = vmatpush2.msra.mxu0 0.0
    %2355 = vmatprep.subr.mxu0 0.0
    %2356 = vmatpush2.msra.mxu0 0.0
    %2357 = vmatprep.mubr.f32.mxu0 0.0
    %2358 = vmatmul.mubr.f32.gmra.mxu0 %v2282
    %v2359 = vpop.f32.mrf.mxu0
    %v2360 = vadd.f32 0.0, %v2359
    %v2361 = vpop.f32.mrf.mxu0
    %v2362 = vadd.f32 0.0, %v2361
    %2363 = vmatprep.mubr.f32.mxu0 0.0
    %2364 = vmatmul.mubr.f32.gmra.mxu0 %v2285
    %v2365 = vpop.f32.mrf.mxu0
    %v2366 = vadd.f32 0.0, %v2365
    %v2367 = vpop.f32.mrf.mxu0
    %v2368 = vadd.f32 0.0, %v2367
    %2369 = vdwg.mxu0
    %v2370 = vadd.f32 %v2251, %v2360
    %v2371 = vadd.f32 %v2252, %v2362
    %v2372 = vadd.f32 %v2253, %v2366
    %v2373 = vadd.f32 %v2254, %v2368
    %v2374 = vld [vmem:[%s1127] sm:$0xff]
    %v2375 = vld [vmem:[%s1127 + $0x8] sm:$0xf]
    %2376 = vrot.lane.b32.xlu0 %v2124, 112
    %v2377 = vpop.permute.xlu0 %2376
    %2378 = vrot.lane.b32.xlu0 %v2125, 112
    %v2379 = vpop.permute.xlu0 %2378
    %2380 = vrot.lane.b32.xlu0 %v2126, 112
    %v2381 = vpop.permute.xlu0 %2380
    %2382 = vrot.lane.b32.xlu0 %v2127, 112
    %v2383 = vpop.permute.xlu0 %2382
    %2384 = vrot.lane.b32.xlu0 %v2128, 112
    %v2385 = vpop.permute.xlu0 %2384
    %2386 = vrot.lane.b32.xlu0 %v2129, 112
    %v2387 = vpop.permute.xlu0 %2386
    %v2388 = vsel %vm1142, %v2377, %v2379
    %v2389 = vsel %vm1142, %v2379, %v2381
    %v2390 = vsel %vm1142, %v2383, %v2385
    %v2391 = vsel %vm1142, %v2385, %v2387
    %v2395 = vsel %vm354, %v2374, 0
    %v2398 = vsel %vm354, %v2375, 0
    %v2400 = vsel %vm94, %v2390, 0
    %v2402 = vsel %vm94, %v2391, 0
    %2404 = vmatprep.subr.mxu0 0.0
    %2405 = vmatpush1.msra.mxu0 0.0
    %2406 = vmatprep.subr.mxu0 0.0
    %2407 = vmatpush1.msra.mxu0 0.0
    %2408 = vmatprep.subr.mxu0 0.0
    %2409 = vmatpush1.msra.mxu0 0.0
    %2410 = vmatprep.subr.mxu0 0.0
    %2411 = vmatpush1.msra.mxu0 0.0
    %2412 = vmatprep.subr.mxu0 0.0
    %2413 = vmatpush1.msra.mxu0 0.0
    %2414 = vmatprep.subr.mxu0 0.0
    %2415 = vmatpush1.msra.mxu0 0.0
    %2416 = vmatprep.subr.mxu0 0.0
    %2417 = vmatpush1.msra.mxu0 0.0
    %2418 = vmatprep.subr.mxu0 0.0
    %2419 = vmatpush1.msra.mxu0 0.0
    %2420 = vmatprep.subr.mxu0 0.0
    %2421 = vmatpush1.msra.mxu0 0.0
    %2422 = vmatprep.subr.mxu0 0.0
    %2423 = vmatpush1.msra.mxu0 0.0
    %2424 = vmatprep.subr.mxu0 0.0
    %2425 = vmatpush1.msra.mxu0 0.0
    %2426 = vmatprep.subr.mxu0 0.0
    %2427 = vmatpush1.msra.mxu0 0.0
    %2428 = vmatprep.subr.mxu0 0.0
    %2429 = vmatpush1.msra.mxu0 0.0
    %2430 = vmatprep.subr.mxu0 0.0
    %2431 = vmatpush1.msra.mxu0 0.0
    %2432 = vmatprep.subr.mxu0 %v2402
    %2433 = vmatpush1.msra.mxu0 %v2400
    %2434 = vmatprep.subr.mxu0 %v2389
    %2435 = vmatpush1.msra.mxu0 %v2388
    %2436 = vmatprep.subr.mxu0 0.0
    %2437 = vmatpush2.msra.mxu0 0.0
    %2438 = vmatprep.subr.mxu0 0.0
    %2439 = vmatpush2.msra.mxu0 0.0
    %2440 = vmatprep.subr.mxu0 0.0
    %2441 = vmatpush2.msra.mxu0 0.0
    %2442 = vmatprep.subr.mxu0 0.0
    %2443 = vmatpush2.msra.mxu0 0.0
    %2444 = vmatprep.subr.mxu0 0.0
    %2445 = vmatpush2.msra.mxu0 0.0
    %2446 = vmatprep.subr.mxu0 0.0
    %2447 = vmatpush2.msra.mxu0 0.0
    %2448 = vmatprep.subr.mxu0 0.0
    %2449 = vmatpush2.msra.mxu0 0.0
    %2450 = vmatprep.subr.mxu0 0.0
    %2451 = vmatpush2.msra.mxu0 0.0
    %2452 = vmatprep.subr.mxu0 0.0
    %2453 = vmatpush2.msra.mxu0 0.0
    %2454 = vmatprep.subr.mxu0 0.0
    %2455 = vmatpush2.msra.mxu0 0.0
    %2456 = vmatprep.subr.mxu0 0.0
    %2457 = vmatpush2.msra.mxu0 0.0
    %2458 = vmatprep.subr.mxu0 0.0
    %2459 = vmatpush2.msra.mxu0 0.0
    %2460 = vmatprep.subr.mxu0 0.0
    %2461 = vmatpush2.msra.mxu0 0.0
    %2462 = vmatprep.subr.mxu0 0.0
    %2463 = vmatpush2.msra.mxu0 0.0
    %2464 = vmatprep.subr.mxu0 0.0
    %2465 = vmatpush2.msra.mxu0 0.0
    %2466 = vmatprep.subr.mxu0 0.0
    %2467 = vmatpush2.msra.mxu0 0.0
    %2468 = vmatprep.mubr.f32.mxu0 0.0
    %2469 = vmatmul.mubr.f32.gmra.mxu0 %v2395
    %v2470 = vpop.f32.mrf.mxu0
    %v2471 = vadd.f32 0.0, %v2470
    %v2472 = vpop.f32.mrf.mxu0
    %v2473 = vadd.f32 0.0, %v2472
    %2474 = vmatprep.mubr.f32.mxu0 0.0
    %2475 = vmatmul.mubr.f32.gmra.mxu0 %v2398
    %v2476 = vpop.f32.mrf.mxu0
    %v2477 = vadd.f32 0.0, %v2476
    %v2478 = vpop.f32.mrf.mxu0
    %v2479 = vadd.f32 0.0, %v2478
    %2480 = vdwg.mxu0
    %v2481 = vadd.f32 %v2370, %v2471
    %v2482 = vadd.f32 %v2371, %v2473
    %v2483 = vadd.f32 %v2372, %v2477
    %v2484 = vadd.f32 %v2373, %v2479
    %2485 = vrot.lane.b32.xlu0 %v2124, 111
    %v2486 = vpop.permute.xlu0 %2485
    %2487 = vrot.lane.b32.xlu0 %v2125, 111
    %v2488 = vpop.permute.xlu0 %2487
    %2489 = vrot.lane.b32.xlu0 %v2126, 111
    %v2490 = vpop.permute.xlu0 %2489
    %2491 = vrot.lane.b32.xlu0 %v2127, 111
    %v2492 = vpop.permute.xlu0 %2491
    %2493 = vrot.lane.b32.xlu0 %v2128, 111
    %v2494 = vpop.permute.xlu0 %2493
    %2495 = vrot.lane.b32.xlu0 %v2129, 111
    %v2496 = vpop.permute.xlu0 %2495
    %v2497 = vsel %vm1252, %v2486, %v2488
    %v2498 = vsel %vm1252, %v2488, %v2490
    %v2499 = vsel %vm1252, %v2492, %v2494
    %v2500 = vsel %vm1252, %v2494, %v2496
    %v2505 = vsel %vm533, %v2497, 0.0
    %v2506 = vsel %vm534, %v2498, 0.0
    %v2507 = vsel %vm533, %v2499, 0.0
    %v2508 = vsel %vm534, %v2500, 0.0
    %v2509 = vld [vmem:[%s1265] sm:$0xff]
    %v2510 = vld [vmem:[%s1265 + $0x8] sm:$0xf]
    %v2512 = vsel %vm354, %v2509, 0
    %v2515 = vsel %vm354, %v2510, 0
    %v2518 = vsel %vm94, %v2507, 0
    %v2521 = vsel %vm94, %v2508, 0
    %2523 = vmatprep.subr.mxu0 0.0
    %2524 = vmatpush1.msra.mxu0 0.0
    %2525 = vmatprep.subr.mxu0 0.0
    %2526 = vmatpush1.msra.mxu0 0.0
    %2527 = vmatprep.subr.mxu0 0.0
    %2528 = vmatpush1.msra.mxu0 0.0
    %2529 = vmatprep.subr.mxu0 0.0
    %2530 = vmatpush1.msra.mxu0 0.0
    %2531 = vmatprep.subr.mxu0 0.0
    %2532 = vmatpush1.msra.mxu0 0.0
    %2533 = vmatprep.subr.mxu0 0.0
    %2534 = vmatpush1.msra.mxu0 0.0
    %2535 = vmatprep.subr.mxu0 0.0
    %2536 = vmatpush1.msra.mxu0 0.0
    %2537 = vmatprep.subr.mxu0 0.0
    %2538 = vmatpush1.msra.mxu0 0.0
    %2539 = vmatprep.subr.mxu0 0.0
    %2540 = vmatpush1.msra.mxu0 0.0
    %2541 = vmatprep.subr.mxu0 0.0
    %2542 = vmatpush1.msra.mxu0 0.0
    %2543 = vmatprep.subr.mxu0 0.0
    %2544 = vmatpush1.msra.mxu0 0.0
    %2545 = vmatprep.subr.mxu0 0.0
    %2546 = vmatpush1.msra.mxu0 0.0
    %2547 = vmatprep.subr.mxu0 0.0
    %2548 = vmatpush1.msra.mxu0 0.0
    %2549 = vmatprep.subr.mxu0 0.0
    %2550 = vmatpush1.msra.mxu0 0.0
    %2551 = vmatprep.subr.mxu0 %v2521
    %2552 = vmatpush1.msra.mxu0 %v2518
    %2553 = vmatprep.subr.mxu0 %v2506
    %2554 = vmatpush1.msra.mxu0 %v2505
    %2555 = vmatprep.subr.mxu0 0.0
    %2556 = vmatpush2.msra.mxu0 0.0
    %2557 = vmatprep.subr.mxu0 0.0
    %2558 = vmatpush2.msra.mxu0 0.0
    %2559 = vmatprep.subr.mxu0 0.0
    %2560 = vmatpush2.msra.mxu0 0.0
    %2561 = vmatprep.subr.mxu0 0.0
    %2562 = vmatpush2.msra.mxu0 0.0
    %2563 = vmatprep.subr.mxu0 0.0
    %2564 = vmatpush2.msra.mxu0 0.0
    %2565 = vmatprep.subr.mxu0 0.0
    %2566 = vmatpush2.msra.mxu0 0.0
    %2567 = vmatprep.subr.mxu0 0.0
    %2568 = vmatpush2.msra.mxu0 0.0
    %2569 = vmatprep.subr.mxu0 0.0
    %2570 = vmatpush2.msra.mxu0 0.0
    %2571 = vmatprep.subr.mxu0 0.0
    %2572 = vmatpush2.msra.mxu0 0.0
    %2573 = vmatprep.subr.mxu0 0.0
    %2574 = vmatpush2.msra.mxu0 0.0
    %2575 = vmatprep.subr.mxu0 0.0
    %2576 = vmatpush2.msra.mxu0 0.0
    %2577 = vmatprep.subr.mxu0 0.0
    %2578 = vmatpush2.msra.mxu0 0.0
    %2579 = vmatprep.subr.mxu0 0.0
    %2580 = vmatpush2.msra.mxu0 0.0
    %2581 = vmatprep.subr.mxu0 0.0
    %2582 = vmatpush2.msra.mxu0 0.0
    %2583 = vmatprep.subr.mxu0 0.0
    %2584 = vmatpush2.msra.mxu0 0.0
    %2585 = vmatprep.subr.mxu0 0.0
    %2586 = vmatpush2.msra.mxu0 0.0
    %2587 = vmatprep.mubr.f32.mxu0 0.0
    %2588 = vmatmul.mubr.f32.gmra.mxu0 %v2512
    %v2589 = vpop.f32.mrf.mxu0
    %v2590 = vadd.f32 0.0, %v2589
    %v2591 = vpop.f32.mrf.mxu0
    %v2592 = vadd.f32 0.0, %v2591
    %2593 = vmatprep.mubr.f32.mxu0 0.0
    %2594 = vmatmul.mubr.f32.gmra.mxu0 %v2515
    %v2595 = vpop.f32.mrf.mxu0
    %v2596 = vadd.f32 0.0, %v2595
    %v2597 = vpop.f32.mrf.mxu0
    %v2598 = vadd.f32 0.0, %v2597
    %2599 = vdwg.mxu0
    %v2600 = vadd.f32 %v2481, %v2590
    %v2601 = vadd.f32 %v2482, %v2592
    %v2602 = vadd.f32 %v2483, %v2596
    %v2603 = vadd.f32 %v2484, %v2598
    %v2604 = vadd.f32 %v2600, %v1364
    %v2605 = vadd.f32 %v2601, %v1364
    %v2606 = vadd.f32 %v2602, %v1369
    %v2607 = vadd.f32 %v2603, %v1369
    %s2608 = scalar_lea.vmem %s8, 32
    %2609 = vst [vmem:[%s2608] sm:$0xff] %v2604
    %2610 = vst [vmem:[%s2608 + $0x8] sm:$0xff] %v2605
    %2611 = vst [vmem:[%s2608 + $0x10] sm:$0xf] %v2606
    %2612 = vst [vmem:[%s2608 + $0x18] sm:$0xf] %v2607
    // Predicated region
    $region38: #{tpu_custom_call.1} parent=1 // pred_check
      _
    $region39: #{tpu_custom_call.1} parent=1 // pred_check_branch
      %2614 = sbr.rel (0) target = $region41
    $region40: #{tpu_custom_call.1} parent=1 // pred_region
      _
    $region41: #{tpu_custom_call.1} parent=1 // pred_fallthru
      _
    // Predicated region
    $region42: #{tpu_custom_call.1} parent=1 // pred_check
      _
    $region43: #{tpu_custom_call.1} parent=1 // pred_check_branch
      %2616 = sbr.rel (0) target = $region45
    $region44: #{tpu_custom_call.1} parent=1 // pred_region
      _
    $region45: #{tpu_custom_call.1} parent=1 // pred_fallthru
      _
    %2617 = vsyncpa [#allocation4], 1

</llo_original>
